<compile_context>
chip_gen: v7x
topology: tpu7x:2x2x1
jax: 0.10.0
libtpu: 0.0.40
codegen_flags: <defaults>
</compile_context>

<pallas_src>
import math

import jax
import jax.numpy as jnp
from jax.experimental import pallas as pl
from jax.experimental.pallas import tpu as pltpu


def _attention_kernel(q_ref, k_ref, v_ref,
                      wq_ref, bq_ref, wk_ref, bk_ref, wv_ref, bv_ref,
                      wo_ref, bo_ref,
                      out_ref,
                      qh_s, kh_s, vh_s, o2d_s, m_s, l_s, acc_s):
    cdtype = wq_ref.dtype                     # MXU operand dtype (f32 or bf16)
    H, _, hd = qh_s.shape                     # num_heads, block_q, head_dim

    i = pl.program_id(1)                      # q tile index
    j = pl.program_id(2)                      # kv tile index
    nk = pl.num_programs(2)

    # ---- per-q-tile init: flash statistics + (pre-scaled) Q projection ----
    @pl.when(j == 0)
    def _():
        m_s[...] = jnp.full(m_s.shape, -jnp.inf, m_s.dtype)
        l_s[...] = jnp.zeros(l_s.shape, l_s.dtype)
        acc_s[...] = jnp.zeros(acc_s.shape, acc_s.dtype)
        # lane-dense (block_q, E) @ (E, D); softmax scale folded into wq/bq.
        qh2d = jnp.dot(q_ref[0], wq_ref[...],
                       preferred_element_type=jnp.float32) + bq_ref[...]
        for h in range(H):                    # head split: static lane slices
            qh_s[h] = qh2d[:, h * hd:(h + 1) * hd].astype(cdtype)

    # ---- per-(batch, kv-tile) K/V projection, cached across q tiles ----
    @pl.when(i == 0)
    def _():
        kh_s[j] = (jnp.dot(k_ref[0], wk_ref[...],
                           preferred_element_type=jnp.float32)
                   + bk_ref[...]).astype(cdtype)
        vh_s[j] = (jnp.dot(v_ref[0], wv_ref[...],
                           preferred_element_type=jnp.float32)
                   + bv_ref[...]).astype(cdtype)

    # ---- flash-attention step for (q tile i, kv tile j) ----
    kh2d = kh_s[j]                            # (block_k, D) lane-dense cache
    vh2d = vh_s[j]
    kh = jnp.stack([kh2d[:, h * hd:(h + 1) * hd] for h in range(H)], axis=0)
    vh = jnp.stack([vh2d[:, h * hd:(h + 1) * hd] for h in range(H)], axis=0)
    qh = qh_s[...]                            # (H, block_q, hd)

    s = jnp.einsum('hqd,hkd->hqk', qh, kh,
                   preferred_element_type=jnp.float32)       # (H, bq, bk)

    m_prev = m_s[...]
    m_new = jnp.maximum(m_prev, jnp.max(s, axis=-1, keepdims=True))
    alpha = jnp.exp(m_prev - m_new)
    p = jnp.exp(s - m_new)                    # unnormalized; normalize post-PV
    l_s[...] = alpha * l_s[...] + jnp.sum(p, axis=-1, keepdims=True)
    acc_s[...] = alpha * acc_s[...] + jnp.einsum(
        'hqk,hkd->hqd', p.astype(cdtype), vh,
        preferred_element_type=jnp.float32)
    m_s[...] = m_new

    # ---- finalize: normalize, recombine heads lane-dense, output projection ----
    @pl.when(j == nk - 1)
    def _():
        inv_l = pl.reciprocal(l_s[...], approx=False)         # exact, (H, bq, 1)
        for h in range(H):
            o2d_s[:, h * hd:(h + 1) * hd] = (acc_s[h] * inv_l[h]).astype(cdtype)
        out = jnp.dot(o2d_s[...], wo_ref[...],
                      preferred_element_type=jnp.float32) + bo_ref[...]
        out_ref[0] = out.astype(out_ref.dtype)


def attention_forward(q, k, v, params, *, num_heads: int,
                      block_q=128, block_k=512,
                      compute_dtype=jnp.bfloat16,
                      vmem_limit_bytes=None):
    """q: (B, Nq, E); k, v: (B, Nk, E).  Returns (B, Nq, E) in q.dtype."""
    B, Nq, E = q.shape
    _, Nk, _ = k.shape
    wq, bq, wk, bk, wv, bv, wo, bo = params
    D = wq.shape[1]                           # internal_dim
    H = num_heads
    assert D % H == 0
    hd = D // H
    out_dtype = q.dtype

    # Fold 1/sqrt(head_dim) into the q projection (offline, zero kernel cost).
    scale = 1.0 / math.sqrt(hd)
    wq = wq * scale
    bq = bq * scale

    # Standard lane-dense weight layouts; operands in compute dtype, biases f32.
    wq_c = wq.astype(compute_dtype)
    wk_c = wk.astype(compute_dtype)
    wv_c = wv.astype(compute_dtype)
    wo_c = wo.astype(compute_dtype)
    bq_2 = bq.reshape(1, D).astype(jnp.float32)
    bk_2 = bk.reshape(1, D).astype(jnp.float32)
    bv_2 = bv.reshape(1, D).astype(jnp.float32)
    bo_2 = bo.reshape(1, E).astype(jnp.float32)

    qc = q.astype(compute_dtype)
    kc = k.astype(compute_dtype)
    vc = v.astype(compute_dtype)

    # Tile fallbacks (NOTE: the full-size fallback inflates VMEM footprint;
    # prefer divisible Nq/Nk at production sizes).
    if block_q is None or block_q >= Nq or Nq % block_q != 0:
        block_q = Nq
    if block_k is None or block_k >= Nk or Nk % block_k != 0:
        block_k = Nk
    n_q = Nq // block_q
    n_k = Nk // block_k

    const2 = lambda shape: pl.BlockSpec(shape, lambda b, i, j: (0, 0))
    # k/v HBM blocks are only needed while i == 0 (projection cached after);
    # collapsing the index afterwards avoids redundant DMA for i > 0.
    kv_idx = lambda b, i, j: (b, jnp.where(i == 0, j, 0), 0)

    cp = dict(dimension_semantics=("parallel", "arbitrary", "arbitrary"))
    if vmem_limit_bytes is not None:
        cp["vmem_limit_bytes"] = vmem_limit_bytes

    return pl.pallas_call(
        _attention_kernel,
        out_shape=jax.ShapeDtypeStruct((B, Nq, E), out_dtype),
        grid_spec=pltpu.PrefetchScalarGridSpec(
            num_scalar_prefetch=0,
            grid=(B, n_q, n_k),
            in_specs=[
                pl.BlockSpec((1, block_q, E), lambda b, i, j: (b, i, 0)),   # q
                pl.BlockSpec((1, block_k, E), kv_idx),                      # k
                pl.BlockSpec((1, block_k, E), kv_idx),                      # v
                const2((E, D)), const2((1, D)),                             # wq, bq
                const2((E, D)), const2((1, D)),                             # wk, bk
                const2((E, D)), const2((1, D)),                             # wv, bv
                const2((D, E)), const2((1, E)),                             # wo, bo
            ],
            out_specs=pl.BlockSpec((1, block_q, E), lambda b, i, j: (b, i, 0)),
            scratch_shapes=[
                pltpu.VMEM((H, block_q, hd), compute_dtype),    # qh_s
                pltpu.VMEM((n_k, block_k, D), compute_dtype),   # kh_s (lane-dense)
                pltpu.VMEM((n_k, block_k, D), compute_dtype),   # vh_s (lane-dense)
                pltpu.VMEM((block_q, D), compute_dtype),        # o2d_s (recombine)
                pltpu.VMEM((H, block_q, 1), jnp.float32),       # m_s
                pltpu.VMEM((H, block_q, 1), jnp.float32),       # l_s
                pltpu.VMEM((H, block_q, hd), jnp.float32),      # acc_s
            ]),
        compiler_params=pltpu.CompilerParams(**cp),
    )(qc, kc, vc, wq_c, bq_2, wk_c, bk_2, wv_c, bv_2, wo_c, bo_2)


def reference_forward(q, k, v, params, *, num_heads: int):
    """Pure-JAX f32 reference mirroring the PyTorch module."""
    wq, bq, wk, bk, wv, bv, wo, bo = params
    B, Nq, E = q.shape
    D = wq.shape[1]
    hd = D // num_heads

    def sep(x):
        b, n, c = x.shape
        return x.reshape(b, n, num_heads, c // num_heads).transpose(0, 2, 1, 3)

    qp = sep(q @ wq + bq)
    kp = sep(k @ wk + bk)
    vp = sep(v @ wv + bv)
    attn = jnp.einsum('bhqd,bhkd->bhqk', qp, kp) / math.sqrt(hd)
    attn = jax.nn.softmax(attn, axis=-1)
    o = jnp.einsum('bhqk,bhkd->bhqd', attn, vp)
    o = o.transpose(0, 2, 1, 3).reshape(B, Nq, D)
    return o @ wo + bo


def init_params(key, embedding_dim, internal_dim):
    keys = jax.random.split(key, 8)
    scale = 0.02
    wq = scale * jax.random.normal(keys[0], (embedding_dim, internal_dim), jnp.float32)
    bq = scale * jax.random.normal(keys[1], (internal_dim,), jnp.float32)
    wk = scale * jax.random.normal(keys[2], (embedding_dim, internal_dim), jnp.float32)
    bk = scale * jax.random.normal(keys[3], (internal_dim,), jnp.float32)
    wv = scale * jax.random.normal(keys[4], (embedding_dim, internal_dim), jnp.float32)
    bv = scale * jax.random.normal(keys[5], (internal_dim,), jnp.float32)
    wo = scale * jax.random.normal(keys[6], (internal_dim, embedding_dim), jnp.float32)
    bo = scale * jax.random.normal(keys[7], (embedding_dim,), jnp.float32)
    return (wq, bq, wk, bk, wv, bv, wo, bo)


if __name__ == "__main__":
    embedding_dim = 32
    num_heads = 4
    downsample_rate = 1
    internal_dim = embedding_dim // downsample_rate

    key = jax.random.PRNGKey(0)
    kq, kk, kv, kp = jax.random.split(key, 4)
    params = init_params(kp, embedding_dim, internal_dim)

    # --- single-tile case (full Nq/Nk resident) ---
    B, Nq, Nk = 2, 8, 8
    q = jax.random.normal(kq, (B, Nq, embedding_dim), jnp.float32)
    k = jax.random.normal(kk, (B, Nk, embedding_dim), jnp.float32)
    v = jax.random.normal(kv, (B, Nk, embedding_dim), jnp.float32)
    ref = reference_forward(q, k, v, params, num_heads=num_heads)

    out_f32 = attention_forward(q, k, v, params, num_heads=num_heads,
                                compute_dtype=jnp.float32)
    out_f32 = jax.block_until_ready(out_f32)
    assert out_f32.shape == (B, Nq, embedding_dim)
    assert jnp.allclose(out_f32, ref, atol=5e-4, rtol=5e-4), "f32 mismatch vs reference"

    out_bf16 = attention_forward(q, k, v, params, num_heads=num_heads,
                                 compute_dtype=jnp.bfloat16)
    out_bf16 = jax.block_until_ready(out_bf16)
    assert jnp.allclose(out_bf16, ref, atol=3e-3, rtol=3e-2), "bf16 mismatch vs reference"

    # --- multi-tile case (exercises q/kv tiling, K/V cache and online softmax) ---
    B2, Nq2, Nk2 = 2, 16, 16
    k2q, k2k, k2v = jax.random.split(jax.random.PRNGKey(1), 3)
    q2 = jax.random.normal(k2q, (B2, Nq2, embedding_dim), jnp.float32)
    k2 = jax.random.normal(k2k, (B2, Nk2, embedding_dim), jnp.float32)
    v2 = jax.random.normal(k2v, (B2, Nk2, embedding_dim), jnp.float32)
    ref2 = reference_forward(q2, k2, v2, params, num_heads=num_heads)
    out2 = attention_forward(q2, k2, v2, params, num_heads=num_heads,
                             block_q=8, block_k=8, compute_dtype=jnp.float32)
    out2 = jax.block_until_ready(out2)
    assert out2.shape == (B2, Nq2, embedding_dim)
    assert jnp.allclose(out2, ref2, atol=5e-4, rtol=5e-4), "tiled f32 mismatch vs reference"

    print("KERNEL_OK")
</pallas_src>

<mosaic_0001>
module attributes {stable_mosaic.version = 11 : i64} {
  func.func @_attention_kernel(%arg0: i32, %arg1: i32, %arg2: i32, %arg3: memref<1x8x32xf32, #tpu.memory_space<vmem>>, %arg4: memref<1x8x32xf32, #tpu.memory_space<vmem>>, %arg5: memref<1x8x32xf32, #tpu.memory_space<vmem>>, %arg6: memref<32x32xf32, #tpu.memory_space<vmem>>, %arg7: memref<1x32xf32, #tpu.memory_space<vmem>>, %arg8: memref<32x32xf32, #tpu.memory_space<vmem>>, %arg9: memref<1x32xf32, #tpu.memory_space<vmem>>, %arg10: memref<32x32xf32, #tpu.memory_space<vmem>>, %arg11: memref<1x32xf32, #tpu.memory_space<vmem>>, %arg12: memref<32x32xf32, #tpu.memory_space<vmem>>, %arg13: memref<1x32xf32, #tpu.memory_space<vmem>>, %arg14: memref<1x8x32xf32, #tpu.memory_space<vmem>>, %arg15: memref<4x8x8xf32, #tpu.memory_space<vmem>>, %arg16: memref<1x8x32xf32, #tpu.memory_space<vmem>>, %arg17: memref<1x8x32xf32, #tpu.memory_space<vmem>>, %arg18: memref<8x32xf32, #tpu.memory_space<vmem>>, %arg19: memref<4x8x1xf32, #tpu.memory_space<vmem>>, %arg20: memref<4x8x1xf32, #tpu.memory_space<vmem>>, %arg21: memref<4x8x8xf32, #tpu.memory_space<vmem>>) attributes {dimension_semantics = [#tpu.dimension_semantics<parallel>, #tpu.dimension_semantics<arbitrary>, #tpu.dimension_semantics<arbitrary>], iteration_bounds = array<i64: 2, 1, 1>, scalar_prefetch = 0 : i64, scratch_operands = 7 : i64, tpu.core_type = #tpu.core_type<tc>, window_params = [{transform_indices = @transform_0, window_bounds = array<i64: 1, 8, 32>}, {transform_indices = @transform_1, window_bounds = array<i64: 1, 8, 32>}, {transform_indices = @transform_2, window_bounds = array<i64: 1, 8, 32>}, {pipeline_mode = #tpu.pipeline_mode<synchronous>, transform_indices = @transform_3, window_bounds = array<i64: 32, 32>}, {pipeline_mode = #tpu.pipeline_mode<synchronous>, transform_indices = @transform_4, window_bounds = array<i64: 1, 32>}, {pipeline_mode = #tpu.pipeline_mode<synchronous>, transform_indices = @transform_5, window_bounds = array<i64: 32, 32>}, {pipeline_mode = #tpu.pipeline_mode<synchronous>, transform_indices = @transform_6, window_bounds = array<i64: 1, 32>}, {pipeline_mode = #tpu.pipeline_mode<synchronous>, transform_indices = @transform_7, window_bounds = array<i64: 32, 32>}, {pipeline_mode = #tpu.pipeline_mode<synchronous>, transform_indices = @transform_8, window_bounds = array<i64: 1, 32>}, {pipeline_mode = #tpu.pipeline_mode<synchronous>, transform_indices = @transform_9, window_bounds = array<i64: 32, 32>}, {pipeline_mode = #tpu.pipeline_mode<synchronous>, transform_indices = @transform_10, window_bounds = array<i64: 1, 32>}, {transform_indices = @transform_11, window_bounds = array<i64: 1, 8, 32>}]} {
    %c0_i32 = arith.constant 0 : i32
    %0 = arith.cmpi eq, %arg2, %c0_i32 : i32
    %1 = arith.extui %0 : i1 to i32
    %c0_i32_0 = arith.constant 0 : i32
    %2 = arith.cmpi ne, %1, %c0_i32_0 : i32
    scf.if %2 {
      %cst_32 = arith.constant 0xFF800000 : f32
      %57 = vector.broadcast %cst_32 : f32 to vector<4x8x1xf32>
      %c0_33 = arith.constant 0 : index
      %c0_34 = arith.constant 0 : index
      %c0_35 = arith.constant 0 : index
      %58 = vector.load %arg19[%c0_33, %c0_34, %c0_35] : memref<4x8x1xf32, #tpu.memory_space<vmem>>, vector<4x8x1xf32>
      tpu.vector_store %arg19[%c0_33, %c0_34, %c0_35], %57 {strides = array<i32>} : memref<4x8x1xf32, #tpu.memory_space<vmem>>, vector<4x8x1xf32>,
      %cst_36 = arith.constant 0.000000e+00 : f32
      %59 = vector.broadcast %cst_36 : f32 to vector<4x8x1xf32>
      %c0_37 = arith.constant 0 : index
      %c0_38 = arith.constant 0 : index
      %c0_39 = arith.constant 0 : index
      %60 = vector.load %arg20[%c0_37, %c0_38, %c0_39] : memref<4x8x1xf32, #tpu.memory_space<vmem>>, vector<4x8x1xf32>
      tpu.vector_store %arg20[%c0_37, %c0_38, %c0_39], %59 {strides = array<i32>} : memref<4x8x1xf32, #tpu.memory_space<vmem>>, vector<4x8x1xf32>,
      %cst_40 = arith.constant 0.000000e+00 : f32
      %61 = vector.broadcast %cst_40 : f32 to vector<4x8x8xf32>
      %c0_41 = arith.constant 0 : index
      %c0_42 = arith.constant 0 : index
      %c0_43 = arith.constant 0 : index
      %62 = vector.load %arg21[%c0_41, %c0_42, %c0_43] : memref<4x8x8xf32, #tpu.memory_space<vmem>>, vector<4x8x8xf32>
      tpu.vector_store %arg21[%c0_41, %c0_42, %c0_43], %61 {strides = array<i32>} : memref<4x8x8xf32, #tpu.memory_space<vmem>>, vector<4x8x8xf32>,
      %c0_44 = arith.constant 0 : index
      %c0_45 = arith.constant 0 : index
      %c0_46 = arith.constant 0 : index
      %63 = vector.load %arg3[%c0_44, %c0_45, %c0_46] : memref<1x8x32xf32, #tpu.memory_space<vmem>>, vector<1x8x32xf32>
      %64 = vector.shape_cast %63 : vector<1x8x32xf32> to vector<8x32xf32>
      %c0_47 = arith.constant 0 : index
      %c0_48 = arith.constant 0 : index
      %65 = vector.load %arg6[%c0_47, %c0_48] : memref<32x32xf32, #tpu.memory_space<vmem>>, vector<32x32xf32>
      %cst_49 = arith.constant dense<0.000000e+00> : vector<8x32xf32>
      %66 = tpu.matmul %64, %65, %cst_49 {dimension_numbers = #tpu.dot_dimension_numbers<[1], [0], [0], [1], [0, 0, 1, 1], [], []>} : vector<8x32xf32>, vector<32x32xf32>, vector<8x32xf32> -> vector<8x32xf32>
      %c0_50 = arith.constant 0 : index
      %c0_51 = arith.constant 0 : index
      %67 = vector.load %arg7[%c0_50, %c0_51] : memref<1x32xf32, #tpu.memory_space<vmem>>, vector<1x32xf32>
      %68 = vector.broadcast %67 : vector<1x32xf32> to vector<8x32xf32>
      %69 = arith.addf %66, %68 : vector<8x32xf32>
      %70 = vector.extract_strided_slice %69 {offsets = [0, 0], sizes = [8, 8], strides = [1, 1]} : vector<8x32xf32> to vector<8x8xf32>
      %c0_52 = arith.constant 0 : index
      %c0_53 = arith.constant 0 : index
      %c0_54 = arith.constant 0 : index
      %71 = vector.load %arg15[%c0_52, %c0_53, %c0_54] : memref<4x8x8xf32, #tpu.memory_space<vmem>>, vector<1x8x8xf32>
      %72 = vector.shape_cast %71 : vector<1x8x8xf32> to vector<8x8xf32>
      %73 = vector.shape_cast %70 : vector<8x8xf32> to vector<1x8x8xf32>
      tpu.vector_store %arg15[%c0_52, %c0_53, %c0_54], %73 {strides = array<i32>} : memref<4x8x8xf32, #tpu.memory_space<vmem>>, vector<1x8x8xf32>,
      %74 = vector.extract_strided_slice %69 {offsets = [0, 8], sizes = [8, 8], strides = [1, 1]} : vector<8x32xf32> to vector<8x8xf32>
      %c1 = arith.constant 1 : index
      %c0_55 = arith.constant 0 : index
      %c0_56 = arith.constant 0 : index
      %75 = vector.load %arg15[%c1, %c0_55, %c0_56] : memref<4x8x8xf32, #tpu.memory_space<vmem>>, vector<1x8x8xf32>
      %76 = vector.shape_cast %75 : vector<1x8x8xf32> to vector<8x8xf32>
      %77 = vector.shape_cast %74 : vector<8x8xf32> to vector<1x8x8xf32>
      tpu.vector_store %arg15[%c1, %c0_55, %c0_56], %77 {strides = array<i32>} : memref<4x8x8xf32, #tpu.memory_space<vmem>>, vector<1x8x8xf32>,
      %78 = vector.extract_strided_slice %69 {offsets = [0, 16], sizes = [8, 8], strides = [1, 1]} : vector<8x32xf32> to vector<8x8xf32>
      %c2 = arith.constant 2 : index
      %c0_57 = arith.constant 0 : index
      %c0_58 = arith.constant 0 : index
      %79 = vector.load %arg15[%c2, %c0_57, %c0_58] : memref<4x8x8xf32, #tpu.memory_space<vmem>>, vector<1x8x8xf32>
      %80 = vector.shape_cast %79 : vector<1x8x8xf32> to vector<8x8xf32>
      %81 = vector.shape_cast %78 : vector<8x8xf32> to vector<1x8x8xf32>
      tpu.vector_store %arg15[%c2, %c0_57, %c0_58], %81 {strides = array<i32>} : memref<4x8x8xf32, #tpu.memory_space<vmem>>, vector<1x8x8xf32>,
      %82 = vector.extract_strided_slice %69 {offsets = [0, 24], sizes = [8, 8], strides = [1, 1]} : vector<8x32xf32> to vector<8x8xf32>
      %c3 = arith.constant 3 : index
      %c0_59 = arith.constant 0 : index
      %c0_60 = arith.constant 0 : index
      %83 = vector.load %arg15[%c3, %c0_59, %c0_60] : memref<4x8x8xf32, #tpu.memory_space<vmem>>, vector<1x8x8xf32>
      %84 = vector.shape_cast %83 : vector<1x8x8xf32> to vector<8x8xf32>
      %85 = vector.shape_cast %82 : vector<8x8xf32> to vector<1x8x8xf32>
      tpu.vector_store %arg15[%c3, %c0_59, %c0_60], %85 {strides = array<i32>} : memref<4x8x8xf32, #tpu.memory_space<vmem>>, vector<1x8x8xf32>,
    } else {
    }
    %c0_i32_1 = arith.constant 0 : i32
    %3 = arith.cmpi eq, %arg1, %c0_i32_1 : i32
    %4 = arith.extui %3 : i1 to i32
    %c0_i32_2 = arith.constant 0 : i32
    %5 = arith.cmpi ne, %4, %c0_i32_2 : i32
    scf.if %5 {
      %c0_32 = arith.constant 0 : index
      %c0_33 = arith.constant 0 : index
      %c0_34 = arith.constant 0 : index
      %57 = vector.load %arg4[%c0_32, %c0_33, %c0_34] : memref<1x8x32xf32, #tpu.memory_space<vmem>>, vector<1x8x32xf32>
      %58 = vector.shape_cast %57 : vector<1x8x32xf32> to vector<8x32xf32>
      %c0_35 = arith.constant 0 : index
      %c0_36 = arith.constant 0 : index
      %59 = vector.load %arg8[%c0_35, %c0_36] : memref<32x32xf32, #tpu.memory_space<vmem>>, vector<32x32xf32>
      %cst_37 = arith.constant dense<0.000000e+00> : vector<8x32xf32>
      %60 = tpu.matmul %58, %59, %cst_37 {dimension_numbers = #tpu.dot_dimension_numbers<[1], [0], [0], [1], [0, 0, 1, 1], [], []>} : vector<8x32xf32>, vector<32x32xf32>, vector<8x32xf32> -> vector<8x32xf32>
      %c0_38 = arith.constant 0 : index
      %c0_39 = arith.constant 0 : index
      %61 = vector.load %arg9[%c0_38, %c0_39] : memref<1x32xf32, #tpu.memory_space<vmem>>, vector<1x32xf32>
      %62 = vector.broadcast %61 : vector<1x32xf32> to vector<8x32xf32>
      %63 = arith.addf %60, %62 : vector<8x32xf32>
      %64 = arith.index_cast %arg2 : i32 to index
      %c0_40 = arith.constant 0 : index
      %c0_41 = arith.constant 0 : index
      %65 = vector.load %arg16[%64, %c0_40, %c0_41] : memref<1x8x32xf32, #tpu.memory_space<vmem>>, vector<1x8x32xf32>
      %66 = vector.shape_cast %65 : vector<1x8x32xf32> to vector<8x32xf32>
      %67 = vector.shape_cast %63 : vector<8x32xf32> to vector<1x8x32xf32>
      tpu.vector_store %arg16[%64, %c0_40, %c0_41], %67 {strides = array<i32>} : memref<1x8x32xf32, #tpu.memory_space<vmem>>, vector<1x8x32xf32>,
      %c0_42 = arith.constant 0 : index
      %c0_43 = arith.constant 0 : index
      %c0_44 = arith.constant 0 : index
      %68 = vector.load %arg5[%c0_42, %c0_43, %c0_44] : memref<1x8x32xf32, #tpu.memory_space<vmem>>, vector<1x8x32xf32>
      %69 = vector.shape_cast %68 : vector<1x8x32xf32> to vector<8x32xf32>
      %c0_45 = arith.constant 0 : index
      %c0_46 = arith.constant 0 : index
      %70 = vector.load %arg10[%c0_45, %c0_46] : memref<32x32xf32, #tpu.memory_space<vmem>>, vector<32x32xf32>
      %cst_47 = arith.constant dense<0.000000e+00> : vector<8x32xf32>
      %71 = tpu.matmul %69, %70, %cst_47 {dimension_numbers = #tpu.dot_dimension_numbers<[1], [0], [0], [1], [0, 0, 1, 1], [], []>} : vector<8x32xf32>, vector<32x32xf32>, vector<8x32xf32> -> vector<8x32xf32>
      %c0_48 = arith.constant 0 : index
      %c0_49 = arith.constant 0 : index
      %72 = vector.load %arg11[%c0_48, %c0_49] : memref<1x32xf32, #tpu.memory_space<vmem>>, vector<1x32xf32>
      %73 = vector.broadcast %72 : vector<1x32xf32> to vector<8x32xf32>
      %74 = arith.addf %71, %73 : vector<8x32xf32>
      %75 = arith.index_cast %arg2 : i32 to index
      %c0_50 = arith.constant 0 : index
      %c0_51 = arith.constant 0 : index
      %76 = vector.load %arg17[%75, %c0_50, %c0_51] : memref<1x8x32xf32, #tpu.memory_space<vmem>>, vector<1x8x32xf32>
      %77 = vector.shape_cast %76 : vector<1x8x32xf32> to vector<8x32xf32>
      %78 = vector.shape_cast %74 : vector<8x32xf32> to vector<1x8x32xf32>
      tpu.vector_store %arg17[%75, %c0_50, %c0_51], %78 {strides = array<i32>} : memref<1x8x32xf32, #tpu.memory_space<vmem>>, vector<1x8x32xf32>,
    } else {
    }
    %6 = arith.index_cast %arg2 : i32 to index
    %c0 = arith.constant 0 : index
    %c0_3 = arith.constant 0 : index
    %7 = vector.load %arg16[%6, %c0, %c0_3] : memref<1x8x32xf32, #tpu.memory_space<vmem>>, vector<1x8x32xf32>
    %8 = vector.shape_cast %7 : vector<1x8x32xf32> to vector<8x32xf32>
    %9 = arith.index_cast %arg2 : i32 to index
    %c0_4 = arith.constant 0 : index
    %c0_5 = arith.constant 0 : index
    %10 = vector.load %arg17[%9, %c0_4, %c0_5] : memref<1x8x32xf32, #tpu.memory_space<vmem>>, vector<1x8x32xf32>
    %11 = vector.shape_cast %10 : vector<1x8x32xf32> to vector<8x32xf32>
    %12 = vector.extract_strided_slice %8 {offsets = [0, 0], sizes = [8, 8], strides = [1, 1]} : vector<8x32xf32> to vector<8x8xf32>
    %13 = vector.extract_strided_slice %8 {offsets = [0, 8], sizes = [8, 8], strides = [1, 1]} : vector<8x32xf32> to vector<8x8xf32>
    %14 = vector.extract_strided_slice %8 {offsets = [0, 16], sizes = [8, 8], strides = [1, 1]} : vector<8x32xf32> to vector<8x8xf32>
    %15 = vector.extract_strided_slice %8 {offsets = [0, 24], sizes = [8, 8], strides = [1, 1]} : vector<8x32xf32> to vector<8x8xf32>
    %16 = vector.shape_cast %12 : vector<8x8xf32> to vector<1x8x8xf32>
    %17 = vector.shape_cast %13 : vector<8x8xf32> to vector<1x8x8xf32>
    %18 = vector.shape_cast %14 : vector<8x8xf32> to vector<1x8x8xf32>
    %19 = vector.shape_cast %15 : vector<8x8xf32> to vector<1x8x8xf32>
    %20 = tpu.concatenate %16, %17, %18, %19 in 0 : vector<1x8x8xf32>, vector<1x8x8xf32>, vector<1x8x8xf32>, vector<1x8x8xf32> -> vector<4x8x8xf32>
    %21 = vector.extract_strided_slice %11 {offsets = [0, 0], sizes = [8, 8], strides = [1, 1]} : vector<8x32xf32> to vector<8x8xf32>
    %22 = vector.extract_strided_slice %11 {offsets = [0, 8], sizes = [8, 8], strides = [1, 1]} : vector<8x32xf32> to vector<8x8xf32>
    %23 = vector.extract_strided_slice %11 {offsets = [0, 16], sizes = [8, 8], strides = [1, 1]} : vector<8x32xf32> to vector<8x8xf32>
    %24 = vector.extract_strided_slice %11 {offsets = [0, 24], sizes = [8, 8], strides = [1, 1]} : vector<8x32xf32> to vector<8x8xf32>
    %25 = vector.shape_cast %21 : vector<8x8xf32> to vector<1x8x8xf32>
    %26 = vector.shape_cast %22 : vector<8x8xf32> to vector<1x8x8xf32>
    %27 = vector.shape_cast %23 : vector<8x8xf32> to vector<1x8x8xf32>
    %28 = vector.shape_cast %24 : vector<8x8xf32> to vector<1x8x8xf32>
    %29 = tpu.concatenate %25, %26, %27, %28 in 0 : vector<1x8x8xf32>, vector<1x8x8xf32>, vector<1x8x8xf32>, vector<1x8x8xf32> -> vector<4x8x8xf32>
    %c0_6 = arith.constant 0 : index
    %c0_7 = arith.constant 0 : index
    %c0_8 = arith.constant 0 : index
    %30 = vector.load %arg15[%c0_6, %c0_7, %c0_8] : memref<4x8x8xf32, #tpu.memory_space<vmem>>, vector<4x8x8xf32>
    "tpu.trace_start"() <{level = 10 : i32, message = "hqd,hkd->hqk"}> : () -> ()
    %cst = arith.constant dense<0.000000e+00> : vector<4x8x8xf32>
    %31 = tpu.matmul %30, %20, %cst {dimension_numbers = #tpu.dot_dimension_numbers<[2], [2], [1], [1], [0, 0, 0, 1, 1, 1], [0], [0]>} : vector<4x8x8xf32>, vector<4x8x8xf32>, vector<4x8x8xf32> -> vector<4x8x8xf32>
    "tpu.trace_stop"() : () -> ()
    %c0_9 = arith.constant 0 : index
    %c0_10 = arith.constant 0 : index
    %c0_11 = arith.constant 0 : index
    %32 = vector.load %arg19[%c0_9, %c0_10, %c0_11] : memref<4x8x1xf32, #tpu.memory_space<vmem>>, vector<4x8x1xf32>
    %cst_12 = arith.constant dense<0xFF800000> : vector<4x8xf32>
    %33 = vector.multi_reduction <maximumf>, %31, %cst_12 [2] : vector<4x8x8xf32> to vector<4x8xf32>
    %34 = vector.shape_cast %33 : vector<4x8xf32> to vector<4x8x1xf32>
    %35 = arith.maximumf %32, %34 : vector<4x8x1xf32>
    %36 = arith.subf %32, %35 : vector<4x8x1xf32>
    %37 = math.exp %36 : vector<4x8x1xf32>
    %38 = vector.broadcast %35 : vector<4x8x1xf32> to vector<4x8x8xf32>
    %39 = arith.subf %31, %38 : vector<4x8x8xf32>
    %40 = math.exp %39 : vector<4x8x8xf32>
    %c0_13 = arith.constant 0 : index
    %c0_14 = arith.constant 0 : index
    %c0_15 = arith.constant 0 : index
    %41 = vector.load %arg20[%c0_13, %c0_14, %c0_15] : memref<4x8x1xf32, #tpu.memory_space<vmem>>, vector<4x8x1xf32>
    %42 = arith.mulf %37, %41 : vector<4x8x1xf32>
    %cst_16 = arith.constant dense<0.000000e+00> : vector<4x8xf32>
    %43 = vector.multi_reduction <add>, %40, %cst_16 [2] : vector<4x8x8xf32> to vector<4x8xf32>
    %44 = vector.shape_cast %43 : vector<4x8xf32> to vector<4x8x1xf32>
    %45 = arith.addf %42, %44 : vector<4x8x1xf32>
    %c0_17 = arith.constant 0 : index
    %c0_18 = arith.constant 0 : index
    %c0_19 = arith.constant 0 : index
    %46 = vector.load %arg20[%c0_17, %c0_18, %c0_19] : memref<4x8x1xf32, #tpu.memory_space<vmem>>, vector<4x8x1xf32>
    tpu.vector_store %arg20[%c0_17, %c0_18, %c0_19], %45 {strides = array<i32>} : memref<4x8x1xf32, #tpu.memory_space<vmem>>, vector<4x8x1xf32>,
    %c0_20 = arith.constant 0 : index
    %c0_21 = arith.constant 0 : index
    %c0_22 = arith.constant 0 : index
    %47 = vector.load %arg21[%c0_20, %c0_21, %c0_22] : memref<4x8x8xf32, #tpu.memory_space<vmem>>, vector<4x8x8xf32>
    %48 = vector.broadcast %37 : vector<4x8x1xf32> to vector<4x8x8xf32>
    %49 = arith.mulf %48, %47 : vector<4x8x8xf32>
    "tpu.trace_start"() <{level = 10 : i32, message = "hqk,hkd->hqd"}> : () -> ()
    %cst_23 = arith.constant dense<0.000000e+00> : vector<4x8x8xf32>
    %50 = tpu.matmul %40, %29, %cst_23 {dimension_numbers = #tpu.dot_dimension_numbers<[2], [1], [1], [2], [0, 0, 0, 1, 1, 2], [0], [0]>} : vector<4x8x8xf32>, vector<4x8x8xf32>, vector<4x8x8xf32> -> vector<4x8x8xf32>
    "tpu.trace_stop"() : () -> ()
    %51 = arith.addf %49, %50 : vector<4x8x8xf32>
    %c0_24 = arith.constant 0 : index
    %c0_25 = arith.constant 0 : index
    %c0_26 = arith.constant 0 : index
    %52 = vector.load %arg21[%c0_24, %c0_25, %c0_26] : memref<4x8x8xf32, #tpu.memory_space<vmem>>, vector<4x8x8xf32>
    tpu.vector_store %arg21[%c0_24, %c0_25, %c0_26], %51 {strides = array<i32>} : memref<4x8x8xf32, #tpu.memory_space<vmem>>, vector<4x8x8xf32>,
    %c0_27 = arith.constant 0 : index
    %c0_28 = arith.constant 0 : index
    %c0_29 = arith.constant 0 : index
    %53 = vector.load %arg19[%c0_27, %c0_28, %c0_29] : memref<4x8x1xf32, #tpu.memory_space<vmem>>, vector<4x8x1xf32>
    tpu.vector_store %arg19[%c0_27, %c0_28, %c0_29], %35 {strides = array<i32>} : memref<4x8x1xf32, #tpu.memory_space<vmem>>, vector<4x8x1xf32>,
    %c0_i32_30 = arith.constant 0 : i32
    %54 = arith.cmpi eq, %arg2, %c0_i32_30 : i32
    %55 = arith.extui %54 : i1 to i32
    %c0_i32_31 = arith.constant 0 : i32
    %56 = arith.cmpi ne, %55, %c0_i32_31 : i32
    scf.if %56 {
      %c0_32 = arith.constant 0 : index
      %c0_33 = arith.constant 0 : index
      %c0_34 = arith.constant 0 : index
      %57 = vector.load %arg20[%c0_32, %c0_33, %c0_34] : memref<4x8x1xf32, #tpu.memory_space<vmem>>, vector<4x8x1xf32>
      %58 = tpu.reciprocal %57 : vector<4x8x1xf32> -> vector<4x8x1xf32>
      %c0_35 = arith.constant 0 : index
      %c0_36 = arith.constant 0 : index
      %c0_37 = arith.constant 0 : index
      %59 = vector.load %arg21[%c0_35, %c0_36, %c0_37] : memref<4x8x8xf32, #tpu.memory_space<vmem>>, vector<1x8x8xf32>
      %60 = vector.shape_cast %59 : vector<1x8x8xf32> to vector<8x8xf32>
      %61 = vector.extract_strided_slice %58 {offsets = [0, 0, 0], sizes = [1, 8, 1], strides = [1, 1, 1]} : vector<4x8x1xf32> to vector<1x8x1xf32>
      %62 = vector.shape_cast %61 : vector<1x8x1xf32> to vector<8x1xf32>
      %63 = vector.broadcast %62 : vector<8x1xf32> to vector<8x8xf32>
      %64 = arith.mulf %60, %63 : vector<8x8xf32>
      %c0_38 = arith.constant 0 : index
      %c0_39 = arith.constant 0 : index
      %65 = vector.load %arg18[%c0_38, %c0_39] : memref<8x32xf32, #tpu.memory_space<vmem>>, vector<8x8xf32>
      tpu.vector_store %arg18[%c0_38, %c0_39], %64 {strides = array<i32>} : memref<8x32xf32, #tpu.memory_space<vmem>>, vector<8x8xf32>,
      %c1 = arith.constant 1 : index
      %c0_40 = arith.constant 0 : index
      %c0_41 = arith.constant 0 : index
      %66 = vector.load %arg21[%c1, %c0_40, %c0_41] : memref<4x8x8xf32, #tpu.memory_space<vmem>>, vector<1x8x8xf32>
      %67 = vector.shape_cast %66 : vector<1x8x8xf32> to vector<8x8xf32>
      %68 = vector.extract_strided_slice %58 {offsets = [1, 0, 0], sizes = [1, 8, 1], strides = [1, 1, 1]} : vector<4x8x1xf32> to vector<1x8x1xf32>
      %69 = vector.shape_cast %68 : vector<1x8x1xf32> to vector<8x1xf32>
      %70 = vector.broadcast %69 : vector<8x1xf32> to vector<8x8xf32>
      %71 = arith.mulf %67, %70 : vector<8x8xf32>
      %c0_42 = arith.constant 0 : index
      %c8 = arith.constant 8 : index
      %72 = vector.load %arg18[%c0_42, %c8] : memref<8x32xf32, #tpu.memory_space<vmem>>, vector<8x8xf32>
      tpu.vector_store %arg18[%c0_42, %c8], %71 {strides = array<i32>} : memref<8x32xf32, #tpu.memory_space<vmem>>, vector<8x8xf32>,
      %c2 = arith.constant 2 : index
      %c0_43 = arith.constant 0 : index
      %c0_44 = arith.constant 0 : index
      %73 = vector.load %arg21[%c2, %c0_43, %c0_44] : memref<4x8x8xf32, #tpu.memory_space<vmem>>, vector<1x8x8xf32>
      %74 = vector.shape_cast %73 : vector<1x8x8xf32> to vector<8x8xf32>
      %75 = vector.extract_strided_slice %58 {offsets = [2, 0, 0], sizes = [1, 8, 1], strides = [1, 1, 1]} : vector<4x8x1xf32> to vector<1x8x1xf32>
      %76 = vector.shape_cast %75 : vector<1x8x1xf32> to vector<8x1xf32>
      %77 = vector.broadcast %76 : vector<8x1xf32> to vector<8x8xf32>
      %78 = arith.mulf %74, %77 : vector<8x8xf32>
      %c0_45 = arith.constant 0 : index
      %c16 = arith.constant 16 : index
      %79 = vector.load %arg18[%c0_45, %c16] : memref<8x32xf32, #tpu.memory_space<vmem>>, vector<8x8xf32>
      tpu.vector_store %arg18[%c0_45, %c16], %78 {strides = array<i32>} : memref<8x32xf32, #tpu.memory_space<vmem>>, vector<8x8xf32>,
      %c3 = arith.constant 3 : index
      %c0_46 = arith.constant 0 : index
      %c0_47 = arith.constant 0 : index
      %80 = vector.load %arg21[%c3, %c0_46, %c0_47] : memref<4x8x8xf32, #tpu.memory_space<vmem>>, vector<1x8x8xf32>
      %81 = vector.shape_cast %80 : vector<1x8x8xf32> to vector<8x8xf32>
      %82 = vector.extract_strided_slice %58 {offsets = [3, 0, 0], sizes = [1, 8, 1], strides = [1, 1, 1]} : vector<4x8x1xf32> to vector<1x8x1xf32>
      %83 = vector.shape_cast %82 : vector<1x8x1xf32> to vector<8x1xf32>
      %84 = vector.broadcast %83 : vector<8x1xf32> to vector<8x8xf32>
      %85 = arith.mulf %81, %84 : vector<8x8xf32>
      %c0_48 = arith.constant 0 : index
      %c24 = arith.constant 24 : index
      %86 = vector.load %arg18[%c0_48, %c24] : memref<8x32xf32, #tpu.memory_space<vmem>>, vector<8x8xf32>
      tpu.vector_store %arg18[%c0_48, %c24], %85 {strides = array<i32>} : memref<8x32xf32, #tpu.memory_space<vmem>>, vector<8x8xf32>,
      %c0_49 = arith.constant 0 : index
      %c0_50 = arith.constant 0 : index
      %87 = vector.load %arg18[%c0_49, %c0_50] : memref<8x32xf32, #tpu.memory_space<vmem>>, vector<8x32xf32>
      %c0_51 = arith.constant 0 : index
      %c0_52 = arith.constant 0 : index
      %88 = vector.load %arg12[%c0_51, %c0_52] : memref<32x32xf32, #tpu.memory_space<vmem>>, vector<32x32xf32>
      %cst_53 = arith.constant dense<0.000000e+00> : vector<8x32xf32>
      %89 = tpu.matmul %87, %88, %cst_53 {dimension_numbers = #tpu.dot_dimension_numbers<[1], [0], [0], [1], [0, 0, 1, 1], [], []>} : vector<8x32xf32>, vector<32x32xf32>, vector<8x32xf32> -> vector<8x32xf32>
      %c0_54 = arith.constant 0 : index
      %c0_55 = arith.constant 0 : index
      %90 = vector.load %arg13[%c0_54, %c0_55] : memref<1x32xf32, #tpu.memory_space<vmem>>, vector<1x32xf32>
      %91 = vector.broadcast %90 : vector<1x32xf32> to vector<8x32xf32>
      %92 = arith.addf %89, %91 : vector<8x32xf32>
      %c0_56 = arith.constant 0 : index
      %c0_57 = arith.constant 0 : index
      %c0_58 = arith.constant 0 : index
      %93 = vector.load %arg14[%c0_56, %c0_57, %c0_58] : memref<1x8x32xf32, #tpu.memory_space<vmem>>, vector<1x8x32xf32>
      %94 = vector.shape_cast %93 : vector<1x8x32xf32> to vector<8x32xf32>
      %95 = vector.shape_cast %92 : vector<8x32xf32> to vector<1x8x32xf32>
      tpu.vector_store %arg14[%c0_56, %c0_57, %c0_58], %95 {strides = array<i32>} : memref<1x8x32xf32, #tpu.memory_space<vmem>>, vector<1x8x32xf32>,
    } else {
    }
    return
  }
  func.func @transform_0(%arg0: i32, %arg1: i32, %arg2: i32) -> (i32, i32, i32) {
    %c0_i32 = arith.constant 0 : i32
    %c0_i32_0 = arith.constant 0 : i32
    return %arg0, %arg1, %c0_i32 : i32, i32, i32
  }
  func.func @transform_1(%arg0: i32, %arg1: i32, %arg2: i32) -> (i32, i32, i32) {
    %c0_i32 = arith.constant 0 : i32
    %0 = arith.cmpi eq, %arg1, %c0_i32 : i32
    %c0_i32_0 = arith.constant 0 : i32
    %1 = arith.select %0, %arg2, %c0_i32_0 : i32
    %c0_i32_1 = arith.constant 0 : i32
    %c0_i32_2 = arith.constant 0 : i32
    return %arg0, %1, %c0_i32_1 : i32, i32, i32
  }
  func.func @transform_2(%arg0: i32, %arg1: i32, %arg2: i32) -> (i32, i32, i32) {
    %c0_i32 = arith.constant 0 : i32
    %0 = arith.cmpi eq, %arg1, %c0_i32 : i32
    %c0_i32_0 = arith.constant 0 : i32
    %1 = arith.select %0, %arg2, %c0_i32_0 : i32
    %c0_i32_1 = arith.constant 0 : i32
    %c0_i32_2 = arith.constant 0 : i32
    return %arg0, %1, %c0_i32_1 : i32, i32, i32
  }
  func.func @transform_3(%arg0: i32, %arg1: i32, %arg2: i32) -> (i32, i32) {
    %c0_i32 = arith.constant 0 : i32
    %c0_i32_0 = arith.constant 0 : i32
    %c0_i32_1 = arith.constant 0 : i32
    return %c0_i32, %c0_i32_0 : i32, i32
  }
  func.func @transform_4(%arg0: i32, %arg1: i32, %arg2: i32) -> (i32, i32) {
    %c0_i32 = arith.constant 0 : i32
    %c0_i32_0 = arith.constant 0 : i32
    %c0_i32_1 = arith.constant 0 : i32
    return %c0_i32, %c0_i32_0 : i32, i32
  }
  func.func @transform_5(%arg0: i32, %arg1: i32, %arg2: i32) -> (i32, i32) {
    %c0_i32 = arith.constant 0 : i32
    %c0_i32_0 = arith.constant 0 : i32
    %c0_i32_1 = arith.constant 0 : i32
    return %c0_i32, %c0_i32_0 : i32, i32
  }
  func.func @transform_6(%arg0: i32, %arg1: i32, %arg2: i32) -> (i32, i32) {
    %c0_i32 = arith.constant 0 : i32
    %c0_i32_0 = arith.constant 0 : i32
    %c0_i32_1 = arith.constant 0 : i32
    return %c0_i32, %c0_i32_0 : i32, i32
  }
  func.func @transform_7(%arg0: i32, %arg1: i32, %arg2: i32) -> (i32, i32) {
    %c0_i32 = arith.constant 0 : i32
    %c0_i32_0 = arith.constant 0 : i32
    %c0_i32_1 = arith.constant 0 : i32
    return %c0_i32, %c0_i32_0 : i32, i32
  }
  func.func @transform_8(%arg0: i32, %arg1: i32, %arg2: i32) -> (i32, i32) {
    %c0_i32 = arith.constant 0 : i32
    %c0_i32_0 = arith.constant 0 : i32
    %c0_i32_1 = arith.constant 0 : i32
    return %c0_i32, %c0_i32_0 : i32, i32
  }
  func.func @transform_9(%arg0: i32, %arg1: i32, %arg2: i32) -> (i32, i32) {
    %c0_i32 = arith.constant 0 : i32
    %c0_i32_0 = arith.constant 0 : i32
    %c0_i32_1 = arith.constant 0 : i32
    return %c0_i32, %c0_i32_0 : i32, i32
  }
  func.func @transform_10(%arg0: i32, %arg1: i32, %arg2: i32) -> (i32, i32) {
    %c0_i32 = arith.constant 0 : i32
    %c0_i32_0 = arith.constant 0 : i32
    %c0_i32_1 = arith.constant 0 : i32
    return %c0_i32, %c0_i32_0 : i32, i32
  }
  func.func @transform_11(%arg0: i32, %arg1: i32, %arg2: i32) -> (i32, i32, i32) {
    %c0_i32 = arith.constant 0 : i32
    %c0_i32_0 = arith.constant 0 : i32
    return %arg0, %arg1, %c0_i32 : i32, i32, i32
  }
}

</mosaic_0001>

<llo_original>
// kernel: tpu_custom_call.1
$region0: #{tpu_custom_call.1}
  #allocation0 [shape = 'u32[]', space=smem, size = 0x4, offset = 0x4, fixed_abs, tag = 'smem constant byte address 0x4 - core index']
  #allocation1 [shape = 'u32[144,128]{1,0:T(1,128)}', space=vmem, size = 0x12000, scoped, tag = 'internal scratch']
  #allocation2 [shape = 'f32[4,8,8]{2,1,0:T(8,128)}', space=vmem, size = 0x4000, scoped, tag = 'scratch operand']
  #allocation3 [shape = 'f32[1,8,32]{2,1,0:T(8,128)}', space=vmem, size = 0x1000, scoped, tag = 'scratch operand']
  #allocation4 [shape = 'f32[1,8,32]{2,1,0:T(8,128)}', space=vmem, size = 0x1000, scoped, tag = 'scratch operand']
  #allocation5 [shape = 'f32[8,32]{1,0:T(8,128)}', space=vmem, size = 0x1000, scoped, tag = 'scratch operand']
  #allocation6 [shape = 'f32[4,8,1]{2,1,0:T(8,128)}', space=vmem, size = 0x4000, scoped, tag = 'scratch operand']
  #allocation7 [shape = 'f32[4,8,1]{2,1,0:T(8,128)}', space=vmem, size = 0x4000, scoped, tag = 'scratch operand']
  #allocation8 [shape = 'f32[4,8,8]{2,1,0:T(8,128)}', space=vmem, size = 0x4000, scoped, tag = 'scratch operand']
  %s0 = inlined_call_operand.hbm [shape: f32[2,8,32], index: 0, kind: input, shape index: {}]
  %s1 = inlined_call_operand.hbm [shape: f32[2,8,32], index: 1, kind: input, shape index: {}]
  %s2 = inlined_call_operand.hbm [shape: f32[2,8,32], index: 2, kind: input, shape index: {}]
  %s3 = inlined_call_operand.hbm [shape: f32[32,32], index: 3, kind: input, shape index: {}]
  %s4 = inlined_call_operand.vmem [shape: f32[1,32], index: 4, kind: input, shape index: {}]
  %s5 = inlined_call_operand.hbm [shape: f32[32,32], index: 5, kind: input, shape index: {}]
  %s6 = inlined_call_operand.vmem [shape: f32[1,32], index: 6, kind: input, shape index: {}]
  %s7 = inlined_call_operand.hbm [shape: f32[32,32], index: 7, kind: input, shape index: {}]
  %s8 = inlined_call_operand.hbm [shape: f32[1,32], index: 8, kind: input, shape index: {}]
  %s9 = inlined_call_operand.vmem [shape: f32[32,32], index: 9, kind: input, shape index: {}]
  %s10 = inlined_call_operand.vmem [shape: f32[1,32], index: 10, kind: input, shape index: {}]
  %s11 = inlined_call_operand.hbm [shape: f32[2,8,32], index: 11, kind: output, shape index: {}]
  %s12 = sld [smem:[#allocation0]]
  $region117: #{tpu_custom_call.1} parent=0
    _
  %s14 = ssub.s32 1, %s12
  %s15 = scalar_select 0, %s14, %s12
  $region1: #{tpu_custom_call.1} parent=0
    #allocation9 [shape = 'u8[8192]{0}', space=vmem, size = 0x2000, scoped, tag = 'input window, operand 0']
    #allocation10 [shape = 's32[2]{0}', space=sflag, size = 0x8, scoped, tag = 'scoped memory for tpu_custom_call.1']
    #allocation11 [shape = 's32[2]{0}', space=sflag, size = 0x8, scoped, tag = 'scoped memory for tpu_custom_call.1']
    #allocation12 [shape = 'u8[8192]{0}', space=vmem, size = 0x2000, scoped, tag = 'input window, operand 1']
    #allocation13 [shape = 's32[2]{0}', space=sflag, size = 0x8, scoped, tag = 'scoped memory for tpu_custom_call.1']
    #allocation14 [shape = 'u8[8192]{0}', space=vmem, size = 0x2000, scoped, tag = 'input window, operand 2']
    #allocation15 [shape = 'u8[16384]{0}', space=vmem, size = 0x4000, scoped, tag = 'input window, operand 3, single buffered']
    #allocation16 [shape = 's32[1]{0}', space=sflag, size = 0x4, scoped, tag = 'scoped memory for tpu_custom_call.1']
    #allocation17 [shape = 'u8[16384]{0}', space=vmem, size = 0x4000, scoped, tag = 'input window, operand 5, single buffered']
    #allocation18 [shape = 'u8[16384]{0}', space=vmem, size = 0x4000, scoped, tag = 'input window, operand 7, single buffered']
    #allocation19 [shape = 's32[1]{0}', space=sflag, size = 0x4, scoped, tag = 'scoped memory for tpu_custom_call.1']
    #allocation20 [shape = 'u8[512]{0}', space=vmem, size = 0x400, scoped, tag = 'input window, operand 8, single buffered']
    #allocation21 [shape = 'u8[8192]{0}', space=vmem, size = 0x2000, scoped, tag = 'output window, operand 0']
    %16 = vsyncpa [#allocation10], 0
    %s17 = scalar_lea.sflag [#allocation10], 1
    %18 = vsyncpa %s17, 0
    %19 = vsyncpa [#allocation13], 0
    %s20 = scalar_lea.sflag [#allocation13], 1
    %21 = vsyncpa %s20, 0
    %22 = vsyncpa [#allocation16], 0
    %23 = vsyncpa [#allocation19], 0
    %24 = vsyncpa [#allocation11], 0
    %s25 = scalar_lea.sflag [#allocation11], 1
    %26 = vsyncpa %s25, 0
    loop: start=0, step=1, limit=4
    $region2: #{tpu_custom_call.1} parent=1 // loop_pre_header
      _
    $region3: #{tpu_custom_call.1} parent=1 // loop_header
      %s28 = sphi 0, %s32
      %p29 = scmp.ge.s32.totalorder %s28, 4
      %s35 = sphi 0, %s54
      %s36 = sphi 0, %s50
      %s37 = sphi 0, %s46
      %s38 = sphi 0, %s35
      %s39 = sphi 0, %s36
      %s40 = sphi 0, %s37
      %s41 = sphi 0, %s38
      %s42 = sphi 0, %s39
      %s43 = sphi 0, %s40
      %s59 = sphi 0, %s61
      %s62 = sphi 0, %s59
      %s63 = sphi 0, %s62
      %s79 = sphi 0, %s63
      %s91 = sphi 0, %s93
      %s94 = sphi 0, %s91
      %s95 = sphi 0, %s94
      %s111 = sphi 0, %s95
      %s123 = sphi 0, %s125
      %s126 = sphi 0, %s123
      %s127 = sphi 0, %s126
      %s143 = sphi 0, %s127
      %s147 = sphi 0, %s147
      %s149 = sphi 0, %s147
      %s150 = sphi 0, %s149
      %s164 = sphi 0, %s150
      %s168 = sphi 0, %s168
      %s170 = sphi 0, %s168
      %s171 = sphi 0, %s170
      %s185 = sphi 0, %s171
      %s189 = sphi 0, %s189
      %s191 = sphi 0, %s189
      %s192 = sphi 0, %s191
      %s206 = sphi 0, %s192
      %s210 = sphi 0, %s210
      %s212 = sphi 0, %s210
      %s213 = sphi 0, %s212
      %s227 = sphi 0, %s213
      %s231 = sphi 0, %s231
      %s233 = sphi 0, %s231
      %s234 = sphi 0, %s233
      %s248 = sphi 0, %s234
      %s252 = sphi 0, %s252
      %s254 = sphi 0, %s252
      %s255 = sphi 0, %s254
      %s269 = sphi 0, %s255
      %s273 = sphi 0, %s273
      %s275 = sphi 0, %s273
      %s276 = sphi 0, %s275
      %s290 = sphi 0, %s276
      %s294 = sphi 0, %s294
      %s296 = sphi 0, %s294
      %s297 = sphi 0, %s296
      %s311 = sphi 0, %s297
      %s319 = sphi 0, %s321
      %s322 = sphi 0, %s319
      %s323 = sphi 0, %s322
      %s339 = sphi 0, %s323
    $region4: #{tpu_custom_call.1} parent=1 // loop_header_branch
      %31 = sbr.rel (%p29) target = $region8
    $region5: #{tpu_custom_call.1} parent=1 // loop_body
      %s33 = ssub.s32 %s28, 1
      %s34 = ssub.s32 %s28, 2
      %s44 = sadd.s32 1, %s37
      %p45 = scmp.ge.s32.totalorder %s44, 1
      %s46 = scalar_select %p45, 0, %s44
      %s47 = sadd.s32 1, %s36
      %s48 = scalar_select %p45, %s47, %s36
      %p49 = scmp.ge.s32.totalorder %s48, 1
      %s50 = scalar_select %p49, 0, %s48
      %s51 = sadd.s32 1, %s35
      %s52 = scalar_select %p49, %s51, %s35
      %p53 = scmp.ge.s32.totalorder %s52, 2
      %s54 = scalar_select %p53, 0, %s52
      %s55 = ssub.s32 %s35, %s54
      %s56 = ssub.s32 %s36, %s50
      %s57 = sor.u32 %s55, %s56
      %p58 = scmp.eq.s32.totalorder %s57, 0
      %s60 = sadd.s32 %s59, 1
      %s61 = scalar_select %p58, %s59, %s60
      %p64 = pneg %p58
      %p65 = scmp.eq.s32.totalorder %s28, 1
      %p66 = por %p64, %p65
      %p67 = scmp.ne.s32.totalorder %s59, %s62
      %p68 = scmp.eq.s32.totalorder %s28, 0
      %p69 = por %p67, %p68
      %p70 = scmp.ne.s32.totalorder %s59, %s62
      %p71 = scmp.eq.s32.totalorder %s33, 1
      %p72 = por %p70, %p71
      %p73 = scmp.ne.s32.totalorder %s62, %s63
      %p74 = scmp.eq.s32.totalorder %s33, 0
      %p75 = por %p73, %p74
      %p76 = scmp.ne.s32.totalorder %s62, %s63
      %p77 = scmp.eq.s32.totalorder %s34, 1
      %p78 = por %p76, %p77
      %p80 = scmp.ne.s32.totalorder %s63, %s79
      %p81 = scmp.eq.s32.totalorder %s34, 0
      %p82 = por %p80, %p81
      %p83 = scmp.eq.s32.totalorder %s36, 0
      %s84 = scalar_select %p83, %s37, 0
      %p85 = scmp.eq.s32.totalorder %s50, 0
      %s86 = scalar_select %p85, %s46, 0
      %s87 = ssub.s32 %s35, %s54
      %s88 = ssub.s32 %s84, %s86
      %s89 = sor.u32 %s87, %s88
      %p90 = scmp.eq.s32.totalorder %s89, 0
      %s92 = sadd.s32 %s91, 1
      %s93 = scalar_select %p90, %s91, %s92
      %p96 = pneg %p90
      %p97 = scmp.eq.s32.totalorder %s28, 1
      %p98 = por %p96, %p97
      %p99 = scmp.ne.s32.totalorder %s91, %s94
      %p100 = scmp.eq.s32.totalorder %s28, 0
      %p101 = por %p99, %p100
      %p102 = scmp.ne.s32.totalorder %s91, %s94
      %p103 = scmp.eq.s32.totalorder %s33, 1
      %p104 = por %p102, %p103
      %p105 = scmp.ne.s32.totalorder %s94, %s95
      %p106 = scmp.eq.s32.totalorder %s33, 0
      %p107 = por %p105, %p106
      %p108 = scmp.ne.s32.totalorder %s94, %s95
      %p109 = scmp.eq.s32.totalorder %s34, 1
      %p110 = por %p108, %p109
      %p112 = scmp.ne.s32.totalorder %s95, %s111
      %p113 = scmp.eq.s32.totalorder %s34, 0
      %p114 = por %p112, %p113
      %p115 = scmp.eq.s32.totalorder %s36, 0
      %s116 = scalar_select %p115, %s37, 0
      %p117 = scmp.eq.s32.totalorder %s50, 0
      %s118 = scalar_select %p117, %s46, 0
      %s119 = ssub.s32 %s35, %s54
      %s120 = ssub.s32 %s116, %s118
      %s121 = sor.u32 %s119, %s120
      %p122 = scmp.eq.s32.totalorder %s121, 0
      %s124 = sadd.s32 %s123, 1
      %s125 = scalar_select %p122, %s123, %s124
      %p128 = pneg %p122
      %p129 = scmp.eq.s32.totalorder %s28, 1
      %p130 = por %p128, %p129
      %p131 = scmp.ne.s32.totalorder %s123, %s126
      %p132 = scmp.eq.s32.totalorder %s28, 0
      %p133 = por %p131, %p132
      %p134 = scmp.ne.s32.totalorder %s123, %s126
      %p135 = scmp.eq.s32.totalorder %s33, 1
      %p136 = por %p134, %p135
      %p137 = scmp.ne.s32.totalorder %s126, %s127
      %p138 = scmp.eq.s32.totalorder %s33, 0
      %p139 = por %p137, %p138
      %p140 = scmp.ne.s32.totalorder %s126, %s127
      %p141 = scmp.eq.s32.totalorder %s34, 1
      %p142 = por %p140, %p141
      %p144 = scmp.ne.s32.totalorder %s127, %s143
      %p145 = scmp.eq.s32.totalorder %s34, 0
      %p146 = por %p144, %p145
      %s148 = sadd.s32 %s147, 1
      %p151 = scmp.eq.s32.totalorder %s28, 1
      %p152 = scmp.ne.s32.totalorder %s147, %s149
      %p153 = scmp.eq.s32.totalorder %s28, 0
      %p154 = por %p152, %p153
      %p155 = scmp.ne.s32.totalorder %s147, %s149
      %p156 = scmp.eq.s32.totalorder %s33, 1
      %p157 = por %p155, %p156
      %p158 = scmp.ne.s32.totalorder %s149, %s150
      %p159 = scmp.eq.s32.totalorder %s33, 0
      %p160 = por %p158, %p159
      %p161 = scmp.ne.s32.totalorder %s149, %s150
      %p162 = scmp.eq.s32.totalorder %s34, 1
      %p163 = por %p161, %p162
      %p165 = scmp.ne.s32.totalorder %s150, %s164
      %p166 = scmp.eq.s32.totalorder %s34, 0
      %p167 = por %p165, %p166
      %s169 = sadd.s32 %s168, 1
      %p172 = scmp.eq.s32.totalorder %s28, 1
      %p173 = scmp.ne.s32.totalorder %s168, %s170
      %p174 = scmp.eq.s32.totalorder %s28, 0
      %p175 = por %p173, %p174
      %p176 = scmp.ne.s32.totalorder %s168, %s170
      %p177 = scmp.eq.s32.totalorder %s33, 1
      %p178 = por %p176, %p177
      %p179 = scmp.ne.s32.totalorder %s170, %s171
      %p180 = scmp.eq.s32.totalorder %s33, 0
      %p181 = por %p179, %p180
      %p182 = scmp.ne.s32.totalorder %s170, %s171
      %p183 = scmp.eq.s32.totalorder %s34, 1
      %p184 = por %p182, %p183
      %p186 = scmp.ne.s32.totalorder %s171, %s185
      %p187 = scmp.eq.s32.totalorder %s34, 0
      %p188 = por %p186, %p187
      %s190 = sadd.s32 %s189, 1
      %p193 = scmp.eq.s32.totalorder %s28, 1
      %p194 = scmp.ne.s32.totalorder %s189, %s191
      %p195 = scmp.eq.s32.totalorder %s28, 0
      %p196 = por %p194, %p195
      %p197 = scmp.ne.s32.totalorder %s189, %s191
      %p198 = scmp.eq.s32.totalorder %s33, 1
      %p199 = por %p197, %p198
      %p200 = scmp.ne.s32.totalorder %s191, %s192
      %p201 = scmp.eq.s32.totalorder %s33, 0
      %p202 = por %p200, %p201
      %p203 = scmp.ne.s32.totalorder %s191, %s192
      %p204 = scmp.eq.s32.totalorder %s34, 1
      %p205 = por %p203, %p204
      %p207 = scmp.ne.s32.totalorder %s192, %s206
      %p208 = scmp.eq.s32.totalorder %s34, 0
      %p209 = por %p207, %p208
      %s211 = sadd.s32 %s210, 1
      %p214 = scmp.eq.s32.totalorder %s28, 1
      %p215 = scmp.ne.s32.totalorder %s210, %s212
      %p216 = scmp.eq.s32.totalorder %s28, 0
      %p217 = por %p215, %p216
      %p218 = scmp.ne.s32.totalorder %s210, %s212
      %p219 = scmp.eq.s32.totalorder %s33, 1
      %p220 = por %p218, %p219
      %p221 = scmp.ne.s32.totalorder %s212, %s213
      %p222 = scmp.eq.s32.totalorder %s33, 0
      %p223 = por %p221, %p222
      %p224 = scmp.ne.s32.totalorder %s212, %s213
      %p225 = scmp.eq.s32.totalorder %s34, 1
      %p226 = por %p224, %p225
      %p228 = scmp.ne.s32.totalorder %s213, %s227
      %p229 = scmp.eq.s32.totalorder %s34, 0
      %p230 = por %p228, %p229
      %s232 = sadd.s32 %s231, 1
      %p235 = scmp.eq.s32.totalorder %s28, 1
      %p236 = scmp.ne.s32.totalorder %s231, %s233
      %p237 = scmp.eq.s32.totalorder %s28, 0
      %p238 = por %p236, %p237
      %p239 = scmp.ne.s32.totalorder %s231, %s233
      %p240 = scmp.eq.s32.totalorder %s33, 1
      %p241 = por %p239, %p240
      %p242 = scmp.ne.s32.totalorder %s233, %s234
      %p243 = scmp.eq.s32.totalorder %s33, 0
      %p244 = por %p242, %p243
      %p245 = scmp.ne.s32.totalorder %s233, %s234
      %p246 = scmp.eq.s32.totalorder %s34, 1
      %p247 = por %p245, %p246
      %p249 = scmp.ne.s32.totalorder %s234, %s248
      %p250 = scmp.eq.s32.totalorder %s34, 0
      %p251 = por %p249, %p250
      %s253 = sadd.s32 %s252, 1
      %p256 = scmp.eq.s32.totalorder %s28, 1
      %p257 = scmp.ne.s32.totalorder %s252, %s254
      %p258 = scmp.eq.s32.totalorder %s28, 0
      %p259 = por %p257, %p258
      %p260 = scmp.ne.s32.totalorder %s252, %s254
      %p261 = scmp.eq.s32.totalorder %s33, 1
      %p262 = por %p260, %p261
      %p263 = scmp.ne.s32.totalorder %s254, %s255
      %p264 = scmp.eq.s32.totalorder %s33, 0
      %p265 = por %p263, %p264
      %p266 = scmp.ne.s32.totalorder %s254, %s255
      %p267 = scmp.eq.s32.totalorder %s34, 1
      %p268 = por %p266, %p267
      %p270 = scmp.ne.s32.totalorder %s255, %s269
      %p271 = scmp.eq.s32.totalorder %s34, 0
      %p272 = por %p270, %p271
      %s274 = sadd.s32 %s273, 1
      %p277 = scmp.eq.s32.totalorder %s28, 1
      %p278 = scmp.ne.s32.totalorder %s273, %s275
      %p279 = scmp.eq.s32.totalorder %s28, 0
      %p280 = por %p278, %p279
      %p281 = scmp.ne.s32.totalorder %s273, %s275
      %p282 = scmp.eq.s32.totalorder %s33, 1
      %p283 = por %p281, %p282
      %p284 = scmp.ne.s32.totalorder %s275, %s276
      %p285 = scmp.eq.s32.totalorder %s33, 0
      %p286 = por %p284, %p285
      %p287 = scmp.ne.s32.totalorder %s275, %s276
      %p288 = scmp.eq.s32.totalorder %s34, 1
      %p289 = por %p287, %p288
      %p291 = scmp.ne.s32.totalorder %s276, %s290
      %p292 = scmp.eq.s32.totalorder %s34, 0
      %p293 = por %p291, %p292
      %s295 = sadd.s32 %s294, 1
      %p298 = scmp.eq.s32.totalorder %s28, 1
      %p299 = scmp.ne.s32.totalorder %s294, %s296
      %p300 = scmp.eq.s32.totalorder %s28, 0
      %p301 = por %p299, %p300
      %p302 = scmp.ne.s32.totalorder %s294, %s296
      %p303 = scmp.eq.s32.totalorder %s33, 1
      %p304 = por %p302, %p303
      %p305 = scmp.ne.s32.totalorder %s296, %s297
      %p306 = scmp.eq.s32.totalorder %s33, 0
      %p307 = por %p305, %p306
      %p308 = scmp.ne.s32.totalorder %s296, %s297
      %p309 = scmp.eq.s32.totalorder %s34, 1
      %p310 = por %p308, %p309
      %p312 = scmp.ne.s32.totalorder %s297, %s311
      %p313 = scmp.eq.s32.totalorder %s34, 0
      %p314 = por %p312, %p313
      %s315 = ssub.s32 %s35, %s54
      %s316 = ssub.s32 %s36, %s50
      %s317 = sor.u32 %s315, %s316
      %p318 = scmp.eq.s32.totalorder %s317, 0
      %s320 = sadd.s32 %s319, 1
      %s321 = scalar_select %p318, %s319, %s320
      %p324 = pneg %p318
      %p325 = scmp.eq.s32.totalorder %s28, 1
      %p326 = por %p324, %p325
      %p327 = scmp.ne.s32.totalorder %s319, %s322
      %p328 = scmp.eq.s32.totalorder %s28, 0
      %p329 = por %p327, %p328
      %p330 = scmp.ne.s32.totalorder %s319, %s322
      %p331 = scmp.eq.s32.totalorder %s33, 1
      %p332 = por %p330, %p331
      %p333 = scmp.ne.s32.totalorder %s322, %s323
      %p334 = scmp.eq.s32.totalorder %s33, 0
      %p335 = por %p333, %p334
      %p336 = scmp.ne.s32.totalorder %s322, %s323
      %p337 = scmp.eq.s32.totalorder %s34, 1
      %p338 = por %p336, %p337
      %p340 = scmp.ne.s32.totalorder %s323, %s339
      %p341 = scmp.eq.s32.totalorder %s34, 0
      %p342 = por %p340, %p341
      %p343 = scmp.le.s32.totalorder 1, %s28
      %p344 = scmp.lt.s32.totalorder %s28, 3
      %p345 = pnand %p343, %p344
      %p346 = pneg %p345
      // Predicated region
      $region9: #{tpu_custom_call.1} parent=5 // pred_check
        _
      $region10: #{tpu_custom_call.1} parent=5 // pred_check_branch
        %348 = sbr.rel (%p345) target = $region12
      $region11: #{tpu_custom_call.1} parent=5 // pred_region
        %s349 = ssub.s32 %s28, 1
        // Predicated region
        $region13: #{tpu_custom_call.1} parent=11 // pred_check
          %p350 = pneg %p160
        $region14: #{tpu_custom_call.1} parent=11 // pred_check_branch
          %352 = sbr.rel (%p350) target = $region16
        $region15: #{tpu_custom_call.1} parent=11 // pred_region
          %s354 = ssub.s32 512, 512
          %355 = vsyncadd [#allocation16], %s354
          %s356 = sshll.u32 [#allocation15], 4
          %s357 = int_to_ptr.vmem [resolvable:$true] %s356
          %362 = dma.hbm_to_vmem [thread:$0]  %s3, 512, %s357, [#allocation16], 128, 128, 8
        $region16: #{tpu_custom_call.1} parent=11 // pred_fallthru
          _
        // Predicated region
        $region17: #{tpu_custom_call.1} parent=11 // pred_check
          %p363 = pneg %p181
        $region18: #{tpu_custom_call.1} parent=11 // pred_check_branch
          %365 = sbr.rel (%p363) target = $region20
        $region19: #{tpu_custom_call.1} parent=11 // pred_region
          _
        $region20: #{tpu_custom_call.1} parent=11 // pred_fallthru
          _
        // Predicated region
        $region21: #{tpu_custom_call.1} parent=11 // pred_check
          %p366 = pneg %p202
        $region22: #{tpu_custom_call.1} parent=11 // pred_check_branch
          %368 = sbr.rel (%p366) target = $region24
        $region23: #{tpu_custom_call.1} parent=11 // pred_region
          %s370 = ssub.s32 512, 512
          %371 = vsyncadd [#allocation16], %s370
          %s372 = sshll.u32 [#allocation17], 4
          %s373 = int_to_ptr.vmem [resolvable:$true] %s372
          %378 = dma.hbm_to_vmem [thread:$0]  %s5, 512, %s373, [#allocation16], 128, 128, 8
        $region24: #{tpu_custom_call.1} parent=11 // pred_fallthru
          _
        // Predicated region
        $region25: #{tpu_custom_call.1} parent=11 // pred_check
          %p379 = pneg %p223
        $region26: #{tpu_custom_call.1} parent=11 // pred_check_branch
          %381 = sbr.rel (%p379) target = $region28
        $region27: #{tpu_custom_call.1} parent=11 // pred_region
          _
        $region28: #{tpu_custom_call.1} parent=11 // pred_fallthru
          _
        // Predicated region
        $region29: #{tpu_custom_call.1} parent=11 // pred_check
          %p382 = pneg %p244
        $region30: #{tpu_custom_call.1} parent=11 // pred_check_branch
          %384 = sbr.rel (%p382) target = $region32
        $region31: #{tpu_custom_call.1} parent=11 // pred_region
          %s386 = ssub.s32 512, 512
          %387 = vsyncadd [#allocation19], %s386
          %s388 = sshll.u32 [#allocation18], 4
          %s389 = int_to_ptr.vmem [resolvable:$true] %s388
          %394 = dma.hbm_to_vmem [thread:$0]  %s7, 512, %s389, [#allocation19], 128, 128, 8
        $region32: #{tpu_custom_call.1} parent=11 // pred_fallthru
          _
        // Predicated region
        $region33: #{tpu_custom_call.1} parent=11 // pred_check
          %p395 = pneg %p265
        $region34: #{tpu_custom_call.1} parent=11 // pred_check_branch
          %397 = sbr.rel (%p395) target = $region36
        $region35: #{tpu_custom_call.1} parent=11 // pred_region
          %s399 = ssub.s32 16, 16
          %400 = vsyncadd [#allocation19], %s399
          %s402 = sshll.u32 [#allocation20], 4
          %s403 = int_to_ptr.vmem [resolvable:$true] %s402
          %405 = dma.hbm_to_vmem [thread:$0]  %s8, 16, %s403, [#allocation19]
        $region36: #{tpu_custom_call.1} parent=11 // pred_fallthru
          _
        // Predicated region
        $region37: #{tpu_custom_call.1} parent=11 // pred_check
          %p406 = pneg %p286
        $region38: #{tpu_custom_call.1} parent=11 // pred_check_branch
          %408 = sbr.rel (%p406) target = $region40
        $region39: #{tpu_custom_call.1} parent=11 // pred_region
          _
        $region40: #{tpu_custom_call.1} parent=11 // pred_fallthru
          _
        // Predicated region
        $region41: #{tpu_custom_call.1} parent=11 // pred_check
          %p409 = pneg %p307
        $region42: #{tpu_custom_call.1} parent=11 // pred_check_branch
          %411 = sbr.rel (%p409) target = $region44
        $region43: #{tpu_custom_call.1} parent=11 // pred_region
          _
        $region44: #{tpu_custom_call.1} parent=11 // pred_fallthru
          _
      $region12: #{tpu_custom_call.1} parent=5 // pred_fallthru
        _
      %p412 = scmp.lt.s32.totalorder %s28, 2
      // Predicated region
      $region45: #{tpu_custom_call.1} parent=5 // pred_check
        %p413 = pneg %p412
      $region46: #{tpu_custom_call.1} parent=5 // pred_check_branch
        %415 = sbr.rel (%p413) target = $region48
      $region47: #{tpu_custom_call.1} parent=5 // pred_region
        // Predicated region
        $region49: #{tpu_custom_call.1} parent=47 // pred_check
          %p416 = pneg %p69
        $region50: #{tpu_custom_call.1} parent=47 // pred_check_branch
          %418 = sbr.rel (%p416) target = $region52
        $region51: #{tpu_custom_call.1} parent=47 // pred_region
          %s419 = sand.u32 %s59, 1
          %s420 = scalar_lea.sflag [#allocation10], %s419
          %s421 = sand.u32 %s59, 1
          %s422 = smul.addr %s421, 8
          %s423 = scalar_lea.vmem [#allocation9], %s422
          %s425 = ssub.s32 128, 128
          %426 = vsyncadd %s420, %s425
          %s427 = sadd.s32 %s36, %s35
          %s428 = smul.addr %s427, 128
          %s429 = scalar_lea.hbm %s0, %s428
          %s431 = sshll.u32 %s423, 4
          %s432 = int_to_ptr.vmem [resolvable:$true] %s431
          %434 = dma.hbm_to_vmem [thread:$0]  %s429, 128, %s432, %s420
        $region52: #{tpu_custom_call.1} parent=47 // pred_fallthru
          _
        // Predicated region
        $region53: #{tpu_custom_call.1} parent=47 // pred_check
          %p435 = pneg %p101
        $region54: #{tpu_custom_call.1} parent=47 // pred_check_branch
          %437 = sbr.rel (%p435) target = $region56
        $region55: #{tpu_custom_call.1} parent=47 // pred_region
          %s438 = sand.u32 %s28, 1
          %s439 = scalar_lea.sflag [#allocation13], %s438
          %s440 = sand.u32 %s91, 1
          %s441 = smul.addr %s440, 8
          %s442 = scalar_lea.vmem [#allocation12], %s441
          %p443 = scmp.eq.s32.totalorder %s36, 0
          %s444 = scalar_select %p443, %s37, 0
          %s446 = ssub.s32 128, 128
          %447 = vsyncadd %s439, %s446
          %s448 = sadd.s32 %s444, %s35
          %s449 = smul.addr %s448, 128
          %s450 = scalar_lea.hbm %s1, %s449
          %s452 = sshll.u32 %s442, 4
          %s453 = int_to_ptr.vmem [resolvable:$true] %s452
          %455 = dma.hbm_to_vmem [thread:$0]  %s450, 128, %s453, %s439
        $region56: #{tpu_custom_call.1} parent=47 // pred_fallthru
          _
        // Predicated region
        $region57: #{tpu_custom_call.1} parent=47 // pred_check
          %p456 = pneg %p133
        $region58: #{tpu_custom_call.1} parent=47 // pred_check_branch
          %458 = sbr.rel (%p456) target = $region60
        $region59: #{tpu_custom_call.1} parent=47 // pred_region
          %s459 = sand.u32 %s28, 1
          %s460 = scalar_lea.sflag [#allocation13], %s459
          %s461 = sand.u32 %s123, 1
          %s462 = smul.addr %s461, 8
          %s463 = scalar_lea.vmem [#allocation14], %s462
          %p464 = scmp.eq.s32.totalorder %s36, 0
          %s465 = scalar_select %p464, %s37, 0
          %s467 = ssub.s32 128, 128
          %468 = vsyncadd %s460, %s467
          %s469 = sadd.s32 %s465, %s35
          %s470 = smul.addr %s469, 128
          %s471 = scalar_lea.hbm %s2, %s470
          %s473 = sshll.u32 %s463, 4
          %s474 = int_to_ptr.vmem [resolvable:$true] %s473
          %476 = dma.hbm_to_vmem [thread:$0]  %s471, 128, %s474, %s460
        $region60: #{tpu_custom_call.1} parent=47 // pred_fallthru
          _
      $region48: #{tpu_custom_call.1} parent=5 // pred_fallthru
        _
      %p477 = scmp.le.s32.totalorder 1, %s28
      %p478 = scmp.lt.s32.totalorder %s28, 3
      %p479 = pnand %p477, %p478
      %p480 = pneg %p479
      // Predicated region
      $region61: #{tpu_custom_call.1} parent=5 // pred_check
        _
      $region62: #{tpu_custom_call.1} parent=5 // pred_check_branch
        %482 = sbr.rel (%p479) target = $region64
      $region63: #{tpu_custom_call.1} parent=5 // pred_region
        %s483 = ssub.s32 %s28, 1
        %s484 = sand.u32 %s62, 1
        %s485 = scalar_lea.sflag [#allocation10], %s484
        %s486 = sand.u32 %s62, 1
        %s487 = smul.addr %s486, 8
        %s488 = scalar_lea.vmem [#allocation9], %s487
        // Predicated region
        $region65: #{tpu_custom_call.1} parent=63 // pred_check
          %p489 = pneg %p75
        $region66: #{tpu_custom_call.1} parent=63 // pred_check_branch
          %491 = sbr.rel (%p489) target = $region68
        $region67: #{tpu_custom_call.1} parent=63 // pred_region
          %492 = dma.done %s485, 128
        $region68: #{tpu_custom_call.1} parent=63 // pred_fallthru
          _
        %s493 = sand.u32 %s33, 1
        %s494 = scalar_lea.sflag [#allocation13], %s493
        %s495 = sand.u32 %s94, 1
        %s496 = smul.addr %s495, 8
        %s497 = scalar_lea.vmem [#allocation12], %s496
        // Predicated region
        $region69: #{tpu_custom_call.1} parent=63 // pred_check
          %p498 = pneg %p107
        $region70: #{tpu_custom_call.1} parent=63 // pred_check_branch
          %500 = sbr.rel (%p498) target = $region72
        $region71: #{tpu_custom_call.1} parent=63 // pred_region
          %501 = dma.done %s494, 128
        $region72: #{tpu_custom_call.1} parent=63 // pred_fallthru
          _
        %s502 = sand.u32 %s33, 1
        %s503 = scalar_lea.sflag [#allocation13], %s502
        %s504 = sand.u32 %s126, 1
        %s505 = smul.addr %s504, 8
        %s506 = scalar_lea.vmem [#allocation14], %s505
        // Predicated region
        $region73: #{tpu_custom_call.1} parent=63 // pred_check
          %p507 = pneg %p139
        $region74: #{tpu_custom_call.1} parent=63 // pred_check_branch
          %509 = sbr.rel (%p507) target = $region76
        $region75: #{tpu_custom_call.1} parent=63 // pred_region
          %510 = dma.done %s503, 128
        $region76: #{tpu_custom_call.1} parent=63 // pred_fallthru
          _
        // Predicated region
        $region77: #{tpu_custom_call.1} parent=63 // pred_check
          %p511 = pneg %p160
        $region78: #{tpu_custom_call.1} parent=63 // pred_check_branch
          %513 = sbr.rel (%p511) target = $region80
        $region79: #{tpu_custom_call.1} parent=63 // pred_region
          %514 = dma.done [#allocation16], 512
        $region80: #{tpu_custom_call.1} parent=63 // pred_fallthru
          _
        // Predicated region
        $region81: #{tpu_custom_call.1} parent=63 // pred_check
          %p515 = pneg %p202
        $region82: #{tpu_custom_call.1} parent=63 // pred_check_branch
          %517 = sbr.rel (%p515) target = $region84
        $region83: #{tpu_custom_call.1} parent=63 // pred_region
          %518 = dma.done [#allocation16], 512
        $region84: #{tpu_custom_call.1} parent=63 // pred_fallthru
          _
        // Predicated region
        $region85: #{tpu_custom_call.1} parent=63 // pred_check
          %p519 = pneg %p244
        $region86: #{tpu_custom_call.1} parent=63 // pred_check_branch
          %521 = sbr.rel (%p519) target = $region88
        $region87: #{tpu_custom_call.1} parent=63 // pred_region
          %522 = dma.done [#allocation19], 512
        $region88: #{tpu_custom_call.1} parent=63 // pred_fallthru
          _
        // Predicated region
        $region89: #{tpu_custom_call.1} parent=63 // pred_check
          %p523 = pneg %p265
        $region90: #{tpu_custom_call.1} parent=63 // pred_check_branch
          %525 = sbr.rel (%p523) target = $region92
        $region91: #{tpu_custom_call.1} parent=63 // pred_region
          %526 = dma.done [#allocation19], 16
        $region92: #{tpu_custom_call.1} parent=63 // pred_fallthru
          _
        %s527 = sand.u32 %s62, 1
        %s528 = scalar_lea.sflag [#allocation10], %s527
        %s529 = sand.u32 %s62, 1
        %s530 = smul.addr %s529, 8
        %s531 = scalar_lea.vmem [#allocation9], %s530
        %p532 = pneg %p75
        %p533 = pneg %p72
        %s534 = sand.u32 %s33, 1
        %s535 = scalar_lea.sflag [#allocation13], %s534
        %s536 = sand.u32 %s94, 1
        %s537 = smul.addr %s536, 8
        %s538 = scalar_lea.vmem [#allocation12], %s537
        %p539 = pneg %p107
        %p540 = pneg %p104
        %s541 = sand.u32 %s33, 1
        %s542 = scalar_lea.sflag [#allocation13], %s541
        %s543 = sand.u32 %s126, 1
        %s544 = smul.addr %s543, 8
        %s545 = scalar_lea.vmem [#allocation14], %s544
        %p546 = pneg %p139
        %p547 = pneg %p136
        %p548 = pneg %p160
        %p549 = pneg %p157
        %p550 = pneg %p181
        %p551 = pneg %p178
        %p552 = pneg %p202
        %p553 = pneg %p199
        %p554 = pneg %p223
        %p555 = pneg %p220
        %p556 = pneg %p244
        %p557 = pneg %p241
        %p558 = pneg %p265
        %p559 = pneg %p262
        %p560 = pneg %p286
        %p561 = pneg %p283
        %p562 = pneg %p307
        %p563 = pneg %p304
        %p564 = pneg %p335
        %p565 = pneg %p332
        %s566 = sand.u32 %s322, 1
        %s567 = scalar_lea.sflag [#allocation11], %s566
        %s568 = sand.u32 %s322, 1
        %s569 = smul.addr %s568, 8
        %s570 = scalar_lea.vmem [#allocation21], %s569
        %p571 = scmp.eq.s32.totalorder %s39, 0
        %s572 = scalar_select %p571, %s40, 0
        %p573 = scmp.eq.s32.totalorder %s39, 0
        %s574 = scalar_select %p573, %s40, 0
        %p575 = scmp.eq.s32.totalorder %s40, 0
        // Predicated region
        $region93: #{tpu_custom_call.1} parent=63 // pred_check
          %p576 = pneg %p575
        $region94: #{tpu_custom_call.1} parent=63 // pred_check_branch
          %578 = sbr.rel (%p576) target = $region96
        $region95: #{tpu_custom_call.1} parent=63 // pred_region
          %vm579 = vcmask 7168
          %580 = vst.msk [vmem:[#allocation6] sm:$0xff] %vm579, -inf
          %581 = vst.msk [vmem:[#allocation6 + $0x8] sm:$0xff] %vm579, -inf
          %582 = vst.msk [vmem:[#allocation6 + $0x10] sm:$0xff] %vm579, -inf
          %583 = vst.msk [vmem:[#allocation6 + $0x18] sm:$0xff] %vm579, -inf
          %584 = vst.msk [vmem:[#allocation7] sm:$0xff] %vm579, 0.0
          %585 = vst.msk [vmem:[#allocation7 + $0x8] sm:$0xff] %vm579, 0.0
          %586 = vst.msk [vmem:[#allocation7 + $0x10] sm:$0xff] %vm579, 0.0
          %587 = vst.msk [vmem:[#allocation7 + $0x18] sm:$0xff] %vm579, 0.0
          %vm588 = vcmask 64512
          %589 = vst.msk [vmem:[#allocation8] sm:$0xff] %vm588, 0.0
          %590 = vst.msk [vmem:[#allocation8 + $0x8] sm:$0xff] %vm588, 0.0
          %591 = vst.msk [vmem:[#allocation8 + $0x10] sm:$0xff] %vm588, 0.0
          %592 = vst.msk [vmem:[#allocation8 + $0x18] sm:$0xff] %vm588, 0.0
          %v593 = vld [vmem:[%s488] sm:$0xff]
          %v594 = vld [vmem:[#allocation15] sm:$0xff]
          %v595 = vld [vmem:[#allocation15 + $0x8] sm:$0xff]
          %v596 = vld [vmem:[#allocation15 + $0x10] sm:$0xff]
          %v597 = vld [vmem:[#allocation15 + $0x18] sm:$0xff]
          %v598 = vld [vmem:[%s4] sm:$0x1]
          %v600 = vlaneseq
          %v601 = vshrl.u32 %v600, 7
          %v602 = vsub.s32 0, %v601
          %v603 = vrot.slane %v598, %v602
          %vm605 = vcmask 261120
          %v607 = vsel %vm605, %v593, 0
          %609 = vmatprep.subr.mxu0 0.0
          %610 = vmatpush1.msra.mxu0 %v594
          %611 = vmatprep.subr.mxu0 0.0
          %612 = vmatpush1.msra.mxu0 %v595
          %613 = vmatprep.subr.mxu0 0.0
          %614 = vmatpush1.msra.mxu0 %v596
          %615 = vmatprep.subr.mxu0 0.0
          %616 = vmatpush1.msra.mxu0 %v597
          %617 = vmatprep.subr.mxu0 0.0
          %618 = vmatpush1.msra.mxu0 0.0
          %619 = vmatprep.subr.mxu0 0.0
          %620 = vmatpush1.msra.mxu0 0.0
          %621 = vmatprep.subr.mxu0 0.0
          %622 = vmatpush1.msra.mxu0 0.0
          %623 = vmatprep.subr.mxu0 0.0
          %624 = vmatpush1.msra.mxu0 0.0
          %625 = vmatprep.subr.mxu0 0.0
          %626 = vmatpush1.msra.mxu0 0.0
          %627 = vmatprep.subr.mxu0 0.0
          %628 = vmatpush1.msra.mxu0 0.0
          %629 = vmatprep.subr.mxu0 0.0
          %630 = vmatpush1.msra.mxu0 0.0
          %631 = vmatprep.subr.mxu0 0.0
          %632 = vmatpush1.msra.mxu0 0.0
          %633 = vmatprep.subr.mxu0 0.0
          %634 = vmatpush1.msra.mxu0 0.0
          %635 = vmatprep.subr.mxu0 0.0
          %636 = vmatpush1.msra.mxu0 0.0
          %637 = vmatprep.subr.mxu0 0.0
          %638 = vmatpush1.msra.mxu0 0.0
          %639 = vmatprep.subr.mxu0 0.0
          %640 = vmatpush1.msra.mxu0 0.0
          %641 = vmatprep.subr.mxu0 0.0
          %642 = vmatpush1.msra.mxu0 0.0
          %643 = vmatprep.subr.mxu0 0.0
          %644 = vmatpush1.msra.mxu0 0.0
          %645 = vmatprep.subr.mxu0 0.0
          %646 = vmatpush1.msra.mxu0 0.0
          %647 = vmatprep.subr.mxu0 0.0
          %648 = vmatpush1.msra.mxu0 0.0
          %649 = vmatprep.subr.mxu0 0.0
          %650 = vmatpush1.msra.mxu0 0.0
          %651 = vmatprep.subr.mxu0 0.0
          %652 = vmatpush1.msra.mxu0 0.0
          %653 = vmatprep.subr.mxu0 0.0
          %654 = vmatpush1.msra.mxu0 0.0
          %655 = vmatprep.subr.mxu0 0.0
          %656 = vmatpush1.msra.mxu0 0.0
          %657 = vmatprep.subr.mxu0 0.0
          %658 = vmatpush1.msra.mxu0 0.0
          %659 = vmatprep.subr.mxu0 0.0
          %660 = vmatpush1.msra.mxu0 0.0
          %661 = vmatprep.subr.mxu0 0.0
          %662 = vmatpush1.msra.mxu0 0.0
          %663 = vmatprep.subr.mxu0 0.0
          %664 = vmatpush1.msra.mxu0 0.0
          %665 = vmatprep.subr.mxu0 0.0
          %666 = vmatpush1.msra.mxu0 0.0
          %667 = vmatprep.subr.mxu0 0.0
          %668 = vmatpush1.msra.mxu0 0.0
          %669 = vmatprep.subr.mxu0 0.0
          %670 = vmatpush1.msra.mxu0 0.0
          %671 = vmatprep.subr.mxu0 0.0
          %672 = vmatpush1.msra.mxu0 0.0
          %673 = vmatprep.mubr.f32.mxu0 0.0
          %674 = vmatmul.mubr.f32.gmra.mrb[0].mxu0 %v607
          %v675 = vpop.f32.mrb[0].mxu0
          %v676 = vadd.f32 %v603, %v675
          %v677 = vpop.f32.mrb[0].mxu0
          %678 = vdwg.mxu0
          %679 = vst.msk [vmem:[#allocation2] sm:$0xff] %vm588, %v676
          %681 = vrot.lane.b32.xlu0 %v676, 120
          %v682 = vpop.permute.xlu0 %681
          %s684 = scalar_lea.vmem [#allocation2], 8
          %685 = vst.msk [vmem:[%s684] sm:$0xff] %vm588, %v682
          %686 = vrot.lane.b32.xlu0 %v676, 112
          %v687 = vpop.permute.xlu0 %686
          %s689 = scalar_lea.vmem [#allocation2], 16
          %690 = vst.msk [vmem:[%s689] sm:$0xff] %vm588, %v687
          %691 = vrot.lane.b32.xlu0 %v676, 104
          %v692 = vpop.permute.xlu0 %691
          %s694 = scalar_lea.vmem [#allocation2], 24
          %695 = vst.msk [vmem:[%s694] sm:$0xff] %vm588, %v692
        $region96: #{tpu_custom_call.1} parent=63 // pred_fallthru
          _
        %p696 = scmp.eq.s32.totalorder %s39, 0
        // Predicated region
        $region97: #{tpu_custom_call.1} parent=63 // pred_check
          %p697 = pneg %p696
        $region98: #{tpu_custom_call.1} parent=63 // pred_check_branch
          %699 = sbr.rel (%p697) target = $region100
        $region99: #{tpu_custom_call.1} parent=63 // pred_region
          %v700 = vld [vmem:[%s497] sm:$0xff]
          %v701 = vld [vmem:[#allocation17] sm:$0xff]
          %v702 = vld [vmem:[#allocation17 + $0x8] sm:$0xff]
          %v703 = vld [vmem:[#allocation17 + $0x10] sm:$0xff]
          %v704 = vld [vmem:[#allocation17 + $0x18] sm:$0xff]
          %v705 = vld [vmem:[%s6] sm:$0x1]
          %v707 = vlaneseq
          %v708 = vshrl.u32 %v707, 7
          %v709 = vsub.s32 0, %v708
          %v710 = vrot.slane %v705, %v709
          %vm712 = vcmask 261120
          %v714 = vsel %vm712, %v700, 0
          %716 = vmatprep.subr.mxu0 0.0
          %717 = vmatpush1.msra.mxu0 %v701
          %718 = vmatprep.subr.mxu0 0.0
          %719 = vmatpush1.msra.mxu0 %v702
          %720 = vmatprep.subr.mxu0 0.0
          %721 = vmatpush1.msra.mxu0 %v703
          %722 = vmatprep.subr.mxu0 0.0
          %723 = vmatpush1.msra.mxu0 %v704
          %724 = vmatprep.subr.mxu0 0.0
          %725 = vmatpush1.msra.mxu0 0.0
          %726 = vmatprep.subr.mxu0 0.0
          %727 = vmatpush1.msra.mxu0 0.0
          %728 = vmatprep.subr.mxu0 0.0
          %729 = vmatpush1.msra.mxu0 0.0
          %730 = vmatprep.subr.mxu0 0.0
          %731 = vmatpush1.msra.mxu0 0.0
          %732 = vmatprep.subr.mxu0 0.0
          %733 = vmatpush1.msra.mxu0 0.0
          %734 = vmatprep.subr.mxu0 0.0
          %735 = vmatpush1.msra.mxu0 0.0
          %736 = vmatprep.subr.mxu0 0.0
          %737 = vmatpush1.msra.mxu0 0.0
          %738 = vmatprep.subr.mxu0 0.0
          %739 = vmatpush1.msra.mxu0 0.0
          %740 = vmatprep.subr.mxu0 0.0
          %741 = vmatpush1.msra.mxu0 0.0
          %742 = vmatprep.subr.mxu0 0.0
          %743 = vmatpush1.msra.mxu0 0.0
          %744 = vmatprep.subr.mxu0 0.0
          %745 = vmatpush1.msra.mxu0 0.0
          %746 = vmatprep.subr.mxu0 0.0
          %747 = vmatpush1.msra.mxu0 0.0
          %748 = vmatprep.subr.mxu0 0.0
          %749 = vmatpush1.msra.mxu0 0.0
          %750 = vmatprep.subr.mxu0 0.0
          %751 = vmatpush1.msra.mxu0 0.0
          %752 = vmatprep.subr.mxu0 0.0
          %753 = vmatpush1.msra.mxu0 0.0
          %754 = vmatprep.subr.mxu0 0.0
          %755 = vmatpush1.msra.mxu0 0.0
          %756 = vmatprep.subr.mxu0 0.0
          %757 = vmatpush1.msra.mxu0 0.0
          %758 = vmatprep.subr.mxu0 0.0
          %759 = vmatpush1.msra.mxu0 0.0
          %760 = vmatprep.subr.mxu0 0.0
          %761 = vmatpush1.msra.mxu0 0.0
          %762 = vmatprep.subr.mxu0 0.0
          %763 = vmatpush1.msra.mxu0 0.0
          %764 = vmatprep.subr.mxu0 0.0
          %765 = vmatpush1.msra.mxu0 0.0
          %766 = vmatprep.subr.mxu0 0.0
          %767 = vmatpush1.msra.mxu0 0.0
          %768 = vmatprep.subr.mxu0 0.0
          %769 = vmatpush1.msra.mxu0 0.0
          %770 = vmatprep.subr.mxu0 0.0
          %771 = vmatpush1.msra.mxu0 0.0
          %772 = vmatprep.subr.mxu0 0.0
          %773 = vmatpush1.msra.mxu0 0.0
          %774 = vmatprep.subr.mxu0 0.0
          %775 = vmatpush1.msra.mxu0 0.0
          %776 = vmatprep.subr.mxu0 0.0
          %777 = vmatpush1.msra.mxu0 0.0
          %778 = vmatprep.subr.mxu0 0.0
          %779 = vmatpush1.msra.mxu0 0.0
          %780 = vmatprep.mubr.f32.mxu0 0.0
          %781 = vmatmul.mubr.f32.gmra.mrb[0].mxu0 %v714
          %v782 = vpop.f32.mrb[0].mxu0
          %v783 = vadd.f32 %v710, %v782
          %v784 = vpop.f32.mrb[0].mxu0
          %785 = vdwg.mxu0
          %s786 = smul.u32 %s40, 8
          %s787 = scalar_lea.vmem [#allocation3], %s786
          %788 = vst.msk [vmem:[%s787] sm:$0xff] %vm712, %v783
          %v789 = vld [vmem:[%s506] sm:$0xff]
          %v790 = vld [vmem:[#allocation18] sm:$0xff]
          %v791 = vld [vmem:[#allocation18 + $0x8] sm:$0xff]
          %v792 = vld [vmem:[#allocation18 + $0x10] sm:$0xff]
          %v793 = vld [vmem:[#allocation18 + $0x18] sm:$0xff]
          %v794 = vld [vmem:[#allocation20] sm:$0x1]
          %v796 = vlaneseq
          %v797 = vshrl.u32 %v796, 7
          %v798 = vsub.s32 0, %v797
          %v799 = vrot.slane %v794, %v798
          %v802 = vsel %vm712, %v789, 0
          %804 = vmatprep.subr.mxu0 0.0
          %805 = vmatpush1.msra.mxu0 %v790
          %806 = vmatprep.subr.mxu0 0.0
          %807 = vmatpush1.msra.mxu0 %v791
          %808 = vmatprep.subr.mxu0 0.0
          %809 = vmatpush1.msra.mxu0 %v792
          %810 = vmatprep.subr.mxu0 0.0
          %811 = vmatpush1.msra.mxu0 %v793
          %812 = vmatprep.subr.mxu0 0.0
          %813 = vmatpush1.msra.mxu0 0.0
          %814 = vmatprep.subr.mxu0 0.0
          %815 = vmatpush1.msra.mxu0 0.0
          %816 = vmatprep.subr.mxu0 0.0
          %817 = vmatpush1.msra.mxu0 0.0
          %818 = vmatprep.subr.mxu0 0.0
          %819 = vmatpush1.msra.mxu0 0.0
          %820 = vmatprep.subr.mxu0 0.0
          %821 = vmatpush1.msra.mxu0 0.0
          %822 = vmatprep.subr.mxu0 0.0
          %823 = vmatpush1.msra.mxu0 0.0
          %824 = vmatprep.subr.mxu0 0.0
          %825 = vmatpush1.msra.mxu0 0.0
          %826 = vmatprep.subr.mxu0 0.0
          %827 = vmatpush1.msra.mxu0 0.0
          %828 = vmatprep.subr.mxu0 0.0
          %829 = vmatpush1.msra.mxu0 0.0
          %830 = vmatprep.subr.mxu0 0.0
          %831 = vmatpush1.msra.mxu0 0.0
          %832 = vmatprep.subr.mxu0 0.0
          %833 = vmatpush1.msra.mxu0 0.0
          %834 = vmatprep.subr.mxu0 0.0
          %835 = vmatpush1.msra.mxu0 0.0
          %836 = vmatprep.subr.mxu0 0.0
          %837 = vmatpush1.msra.mxu0 0.0
          %838 = vmatprep.subr.mxu0 0.0
          %839 = vmatpush1.msra.mxu0 0.0
          %840 = vmatprep.subr.mxu0 0.0
          %841 = vmatpush1.msra.mxu0 0.0
          %842 = vmatprep.subr.mxu0 0.0
          %843 = vmatpush1.msra.mxu0 0.0
          %844 = vmatprep.subr.mxu0 0.0
          %845 = vmatpush1.msra.mxu0 0.0
          %846 = vmatprep.subr.mxu0 0.0
          %847 = vmatpush1.msra.mxu0 0.0
          %848 = vmatprep.subr.mxu0 0.0
          %849 = vmatpush1.msra.mxu0 0.0
          %850 = vmatprep.subr.mxu0 0.0
          %851 = vmatpush1.msra.mxu0 0.0
          %852 = vmatprep.subr.mxu0 0.0
          %853 = vmatpush1.msra.mxu0 0.0
          %854 = vmatprep.subr.mxu0 0.0
          %855 = vmatpush1.msra.mxu0 0.0
          %856 = vmatprep.subr.mxu0 0.0
          %857 = vmatpush1.msra.mxu0 0.0
          %858 = vmatprep.subr.mxu0 0.0
          %859 = vmatpush1.msra.mxu0 0.0
          %860 = vmatprep.subr.mxu0 0.0
          %861 = vmatpush1.msra.mxu0 0.0
          %862 = vmatprep.subr.mxu0 0.0
          %863 = vmatpush1.msra.mxu0 0.0
          %864 = vmatprep.subr.mxu0 0.0
          %865 = vmatpush1.msra.mxu0 0.0
          %866 = vmatprep.subr.mxu0 0.0
          %867 = vmatpush1.msra.mxu0 0.0
          %868 = vmatprep.mubr.f32.mxu0 0.0
          %869 = vmatmul.mubr.f32.gmra.mrb[0].mxu0 %v802
          %v870 = vpop.f32.mrb[0].mxu0
          %v871 = vadd.f32 %v799, %v870
          %v872 = vpop.f32.mrb[0].mxu0
          %873 = vdwg.mxu0
          %s874 = scalar_lea.vmem [#allocation4], %s786
          %875 = vst.msk [vmem:[%s874] sm:$0xff] %vm712, %v871
        $region100: #{tpu_custom_call.1} parent=63 // pred_fallthru
          _
        %s876 = smul.u32 %s40, 8
        %s877 = scalar_lea.vmem [#allocation3], %s876
        %v878 = vld [vmem:[%s877] sm:$0xff]
        %s879 = scalar_lea.vmem [#allocation4], %s876
        %v880 = vld [vmem:[%s879] sm:$0xff]
        %882 = vrot.lane.b32.xlu0 %v878, 120
        %v883 = vpop.permute.xlu0 %882
        %884 = vrot.lane.b32.xlu0 %v878, 112
        %v885 = vpop.permute.xlu0 %884
        %886 = vrot.lane.b32.xlu0 %v878, 104
        %v887 = vpop.permute.xlu0 %886
        %889 = vrot.lane.b32.xlu0 %v880, 120
        %v890 = vpop.permute.xlu0 %889
        %892 = vrot.lane.b32.xlu0 %v880, 112
        %v893 = vpop.permute.xlu0 %892
        %895 = vrot.lane.b32.xlu0 %v880, 104
        %v896 = vpop.permute.xlu0 %895
        %v898 = vld [vmem:[#allocation2] sm:$0xff]
        %v899 = vld [vmem:[#allocation2 + $0x8] sm:$0xff]
        %v900 = vld [vmem:[#allocation2 + $0x10] sm:$0xff]
        %v901 = vld [vmem:[#allocation2 + $0x18] sm:$0xff]
        %vm902 = vcmask 64512
        %v904 = vsel %vm902, %v898, 0
        %v906 = vsel %vm902, %v878, 0
        %908 = vmatprep.subr.mxu0 0.0
        %909 = vmatpush1.xpose.msra.mxu0 %v906
        %910 = vmatprep.subr.mxu0 0.0
        %911 = vmatpush1.xpose.msra.mxu0 0.0
        %912 = vmatprep.subr.mxu0 0.0
        %913 = vmatpush1.xpose.msra.mxu0 0.0
        %914 = vmatprep.subr.mxu0 0.0
        %915 = vmatpush1.xpose.msra.mxu0 0.0
        %916 = vmatprep.subr.mxu0 0.0
        %917 = vmatpush1.xpose.msra.mxu0 0.0
        %918 = vmatprep.subr.mxu0 0.0
        %919 = vmatpush1.xpose.msra.mxu0 0.0
        %920 = vmatprep.subr.mxu0 0.0
        %921 = vmatpush1.xpose.msra.mxu0 0.0
        %922 = vmatprep.subr.mxu0 0.0
        %923 = vmatpush1.xpose.msra.mxu0 0.0
        %924 = vmatprep.subr.mxu0 0.0
        %925 = vmatpush1.xpose.msra.mxu0 0.0
        %926 = vmatprep.subr.mxu0 0.0
        %927 = vmatpush1.xpose.msra.mxu0 0.0
        %928 = vmatprep.subr.mxu0 0.0
        %929 = vmatpush1.xpose.msra.mxu0 0.0
        %930 = vmatprep.subr.mxu0 0.0
        %931 = vmatpush1.xpose.msra.mxu0 0.0
        %932 = vmatprep.subr.mxu0 0.0
        %933 = vmatpush1.xpose.msra.mxu0 0.0
        %934 = vmatprep.subr.mxu0 0.0
        %935 = vmatpush1.xpose.msra.mxu0 0.0
        %936 = vmatprep.subr.mxu0 0.0
        %937 = vmatpush1.xpose.msra.mxu0 0.0
        %938 = vmatprep.subr.mxu0 0.0
        %939 = vmatpush1.xpose.msra.mxu0 0.0
        %940 = vmatprep.subr.mxu0 0.0
        %941 = vmatpush1.xpose.msra.mxu0 0.0
        %942 = vmatprep.subr.mxu0 0.0
        %943 = vmatpush1.xpose.msra.mxu0 0.0
        %944 = vmatprep.subr.mxu0 0.0
        %945 = vmatpush1.xpose.msra.mxu0 0.0
        %946 = vmatprep.subr.mxu0 0.0
        %947 = vmatpush1.xpose.msra.mxu0 0.0
        %948 = vmatprep.subr.mxu0 0.0
        %949 = vmatpush1.xpose.msra.mxu0 0.0
        %950 = vmatprep.subr.mxu0 0.0
        %951 = vmatpush1.xpose.msra.mxu0 0.0
        %952 = vmatprep.subr.mxu0 0.0
        %953 = vmatpush1.xpose.msra.mxu0 0.0
        %954 = vmatprep.subr.mxu0 0.0
        %955 = vmatpush1.xpose.msra.mxu0 0.0
        %956 = vmatprep.subr.mxu0 0.0
        %957 = vmatpush1.xpose.msra.mxu0 0.0
        %958 = vmatprep.subr.mxu0 0.0
        %959 = vmatpush1.xpose.msra.mxu0 0.0
        %960 = vmatprep.subr.mxu0 0.0
        %961 = vmatpush1.xpose.msra.mxu0 0.0
        %962 = vmatprep.subr.mxu0 0.0
        %963 = vmatpush1.xpose.msra.mxu0 0.0
        %964 = vmatprep.subr.mxu0 0.0
        %965 = vmatpush1.xpose.msra.mxu0 0.0
        %966 = vmatprep.subr.mxu0 0.0
        %967 = vmatpush1.xpose.msra.mxu0 0.0
        %968 = vmatprep.subr.mxu0 0.0
        %969 = vmatpush1.xpose.msra.mxu0 0.0
        %970 = vmatprep.subr.mxu0 0.0
        %971 = vmatpush1.xpose.msra.mxu0 0.0
        %972 = vmatprep.mubr.f32.mxu0 0.0
        %973 = vmatmul.mubr.f32.gmra.mrb[0].mxu0 %v904
        %v974 = vpop.f32.mrb[0].mxu0
        %v975 = vadd.f32 0.0, %v974
        %v976 = vpop.f32.mrb[0].mxu0
        %977 = vdwg.mxu0
        %v979 = vsel %vm902, %v899, 0
        %v981 = vsel %vm902, %v883, 0
        %983 = vmatprep.subr.mxu0 0.0
        %984 = vmatpush1.xpose.msra.mxu0 %v981
        %985 = vmatprep.subr.mxu0 0.0
        %986 = vmatpush1.xpose.msra.mxu0 0.0
        %987 = vmatprep.subr.mxu0 0.0
        %988 = vmatpush1.xpose.msra.mxu0 0.0
        %989 = vmatprep.subr.mxu0 0.0
        %990 = vmatpush1.xpose.msra.mxu0 0.0
        %991 = vmatprep.subr.mxu0 0.0
        %992 = vmatpush1.xpose.msra.mxu0 0.0
        %993 = vmatprep.subr.mxu0 0.0
        %994 = vmatpush1.xpose.msra.mxu0 0.0
        %995 = vmatprep.subr.mxu0 0.0
        %996 = vmatpush1.xpose.msra.mxu0 0.0
        %997 = vmatprep.subr.mxu0 0.0
        %998 = vmatpush1.xpose.msra.mxu0 0.0
        %999 = vmatprep.subr.mxu0 0.0
        %1000 = vmatpush1.xpose.msra.mxu0 0.0
        %1001 = vmatprep.subr.mxu0 0.0
        %1002 = vmatpush1.xpose.msra.mxu0 0.0
        %1003 = vmatprep.subr.mxu0 0.0
        %1004 = vmatpush1.xpose.msra.mxu0 0.0
        %1005 = vmatprep.subr.mxu0 0.0
        %1006 = vmatpush1.xpose.msra.mxu0 0.0
        %1007 = vmatprep.subr.mxu0 0.0
        %1008 = vmatpush1.xpose.msra.mxu0 0.0
        %1009 = vmatprep.subr.mxu0 0.0
        %1010 = vmatpush1.xpose.msra.mxu0 0.0
        %1011 = vmatprep.subr.mxu0 0.0
        %1012 = vmatpush1.xpose.msra.mxu0 0.0
        %1013 = vmatprep.subr.mxu0 0.0
        %1014 = vmatpush1.xpose.msra.mxu0 0.0
        %1015 = vmatprep.subr.mxu0 0.0
        %1016 = vmatpush1.xpose.msra.mxu0 0.0
        %1017 = vmatprep.subr.mxu0 0.0
        %1018 = vmatpush1.xpose.msra.mxu0 0.0
        %1019 = vmatprep.subr.mxu0 0.0
        %1020 = vmatpush1.xpose.msra.mxu0 0.0
        %1021 = vmatprep.subr.mxu0 0.0
        %1022 = vmatpush1.xpose.msra.mxu0 0.0
        %1023 = vmatprep.subr.mxu0 0.0
        %1024 = vmatpush1.xpose.msra.mxu0 0.0
        %1025 = vmatprep.subr.mxu0 0.0
        %1026 = vmatpush1.xpose.msra.mxu0 0.0
        %1027 = vmatprep.subr.mxu0 0.0
        %1028 = vmatpush1.xpose.msra.mxu0 0.0
        %1029 = vmatprep.subr.mxu0 0.0
        %1030 = vmatpush1.xpose.msra.mxu0 0.0
        %1031 = vmatprep.subr.mxu0 0.0
        %1032 = vmatpush1.xpose.msra.mxu0 0.0
        %1033 = vmatprep.subr.mxu0 0.0
        %1034 = vmatpush1.xpose.msra.mxu0 0.0
        %1035 = vmatprep.subr.mxu0 0.0
        %1036 = vmatpush1.xpose.msra.mxu0 0.0
        %1037 = vmatprep.subr.mxu0 0.0
        %1038 = vmatpush1.xpose.msra.mxu0 0.0
        %1039 = vmatprep.subr.mxu0 0.0
        %1040 = vmatpush1.xpose.msra.mxu0 0.0
        %1041 = vmatprep.subr.mxu0 0.0
        %1042 = vmatpush1.xpose.msra.mxu0 0.0
        %1043 = vmatprep.subr.mxu0 0.0
        %1044 = vmatpush1.xpose.msra.mxu0 0.0
        %1045 = vmatprep.subr.mxu0 0.0
        %1046 = vmatpush1.xpose.msra.mxu0 0.0
        %1047 = vmatprep.mubr.f32.mxu0 0.0
        %1048 = vmatmul.mubr.f32.gmra.mrb[0].mxu0 %v979
        %v1049 = vpop.f32.mrb[0].mxu0
        %v1050 = vadd.f32 0.0, %v1049
        %v1051 = vpop.f32.mrb[0].mxu0
        %1052 = vdwg.mxu0
        %v1054 = vsel %vm902, %v900, 0
        %v1056 = vsel %vm902, %v885, 0
        %1058 = vmatprep.subr.mxu0 0.0
        %1059 = vmatpush1.xpose.msra.mxu0 %v1056
        %1060 = vmatprep.subr.mxu0 0.0
        %1061 = vmatpush1.xpose.msra.mxu0 0.0
        %1062 = vmatprep.subr.mxu0 0.0
        %1063 = vmatpush1.xpose.msra.mxu0 0.0
        %1064 = vmatprep.subr.mxu0 0.0
        %1065 = vmatpush1.xpose.msra.mxu0 0.0
        %1066 = vmatprep.subr.mxu0 0.0
        %1067 = vmatpush1.xpose.msra.mxu0 0.0
        %1068 = vmatprep.subr.mxu0 0.0
        %1069 = vmatpush1.xpose.msra.mxu0 0.0
        %1070 = vmatprep.subr.mxu0 0.0
        %1071 = vmatpush1.xpose.msra.mxu0 0.0
        %1072 = vmatprep.subr.mxu0 0.0
        %1073 = vmatpush1.xpose.msra.mxu0 0.0
        %1074 = vmatprep.subr.mxu0 0.0
        %1075 = vmatpush1.xpose.msra.mxu0 0.0
        %1076 = vmatprep.subr.mxu0 0.0
        %1077 = vmatpush1.xpose.msra.mxu0 0.0
        %1078 = vmatprep.subr.mxu0 0.0
        %1079 = vmatpush1.xpose.msra.mxu0 0.0
        %1080 = vmatprep.subr.mxu0 0.0
        %1081 = vmatpush1.xpose.msra.mxu0 0.0
        %1082 = vmatprep.subr.mxu0 0.0
        %1083 = vmatpush1.xpose.msra.mxu0 0.0
        %1084 = vmatprep.subr.mxu0 0.0
        %1085 = vmatpush1.xpose.msra.mxu0 0.0
        %1086 = vmatprep.subr.mxu0 0.0
        %1087 = vmatpush1.xpose.msra.mxu0 0.0
        %1088 = vmatprep.subr.mxu0 0.0
        %1089 = vmatpush1.xpose.msra.mxu0 0.0
        %1090 = vmatprep.subr.mxu0 0.0
        %1091 = vmatpush1.xpose.msra.mxu0 0.0
        %1092 = vmatprep.subr.mxu0 0.0
        %1093 = vmatpush1.xpose.msra.mxu0 0.0
        %1094 = vmatprep.subr.mxu0 0.0
        %1095 = vmatpush1.xpose.msra.mxu0 0.0
        %1096 = vmatprep.subr.mxu0 0.0
        %1097 = vmatpush1.xpose.msra.mxu0 0.0
        %1098 = vmatprep.subr.mxu0 0.0
        %1099 = vmatpush1.xpose.msra.mxu0 0.0
        %1100 = vmatprep.subr.mxu0 0.0
        %1101 = vmatpush1.xpose.msra.mxu0 0.0
        %1102 = vmatprep.subr.mxu0 0.0
        %1103 = vmatpush1.xpose.msra.mxu0 0.0
        %1104 = vmatprep.subr.mxu0 0.0
        %1105 = vmatpush1.xpose.msra.mxu0 0.0
        %1106 = vmatprep.subr.mxu0 0.0
        %1107 = vmatpush1.xpose.msra.mxu0 0.0
        %1108 = vmatprep.subr.mxu0 0.0
        %1109 = vmatpush1.xpose.msra.mxu0 0.0
        %1110 = vmatprep.subr.mxu0 0.0
        %1111 = vmatpush1.xpose.msra.mxu0 0.0
        %1112 = vmatprep.subr.mxu0 0.0
        %1113 = vmatpush1.xpose.msra.mxu0 0.0
        %1114 = vmatprep.subr.mxu0 0.0
        %1115 = vmatpush1.xpose.msra.mxu0 0.0
        %1116 = vmatprep.subr.mxu0 0.0
        %1117 = vmatpush1.xpose.msra.mxu0 0.0
        %1118 = vmatprep.subr.mxu0 0.0
        %1119 = vmatpush1.xpose.msra.mxu0 0.0
        %1120 = vmatprep.subr.mxu0 0.0
        %1121 = vmatpush1.xpose.msra.mxu0 0.0
        %1122 = vmatprep.mubr.f32.mxu0 0.0
        %1123 = vmatmul.mubr.f32.gmra.mrb[0].mxu0 %v1054
        %v1124 = vpop.f32.mrb[0].mxu0
        %v1125 = vadd.f32 0.0, %v1124
        %v1126 = vpop.f32.mrb[0].mxu0
        %1127 = vdwg.mxu0
        %v1129 = vsel %vm902, %v901, 0
        %v1131 = vsel %vm902, %v887, 0
        %1133 = vmatprep.subr.mxu0 0.0
        %1134 = vmatpush1.xpose.msra.mxu0 %v1131
        %1135 = vmatprep.subr.mxu0 0.0
        %1136 = vmatpush1.xpose.msra.mxu0 0.0
        %1137 = vmatprep.subr.mxu0 0.0
        %1138 = vmatpush1.xpose.msra.mxu0 0.0
        %1139 = vmatprep.subr.mxu0 0.0
        %1140 = vmatpush1.xpose.msra.mxu0 0.0
        %1141 = vmatprep.subr.mxu0 0.0
        %1142 = vmatpush1.xpose.msra.mxu0 0.0
        %1143 = vmatprep.subr.mxu0 0.0
        %1144 = vmatpush1.xpose.msra.mxu0 0.0
        %1145 = vmatprep.subr.mxu0 0.0
        %1146 = vmatpush1.xpose.msra.mxu0 0.0
        %1147 = vmatprep.subr.mxu0 0.0
        %1148 = vmatpush1.xpose.msra.mxu0 0.0
        %1149 = vmatprep.subr.mxu0 0.0
        %1150 = vmatpush1.xpose.msra.mxu0 0.0
        %1151 = vmatprep.subr.mxu0 0.0
        %1152 = vmatpush1.xpose.msra.mxu0 0.0
        %1153 = vmatprep.subr.mxu0 0.0
        %1154 = vmatpush1.xpose.msra.mxu0 0.0
        %1155 = vmatprep.subr.mxu0 0.0
        %1156 = vmatpush1.xpose.msra.mxu0 0.0
        %1157 = vmatprep.subr.mxu0 0.0
        %1158 = vmatpush1.xpose.msra.mxu0 0.0
        %1159 = vmatprep.subr.mxu0 0.0
        %1160 = vmatpush1.xpose.msra.mxu0 0.0
        %1161 = vmatprep.subr.mxu0 0.0
        %1162 = vmatpush1.xpose.msra.mxu0 0.0
        %1163 = vmatprep.subr.mxu0 0.0
        %1164 = vmatpush1.xpose.msra.mxu0 0.0
        %1165 = vmatprep.subr.mxu0 0.0
        %1166 = vmatpush1.xpose.msra.mxu0 0.0
        %1167 = vmatprep.subr.mxu0 0.0
        %1168 = vmatpush1.xpose.msra.mxu0 0.0
        %1169 = vmatprep.subr.mxu0 0.0
        %1170 = vmatpush1.xpose.msra.mxu0 0.0
        %1171 = vmatprep.subr.mxu0 0.0
        %1172 = vmatpush1.xpose.msra.mxu0 0.0
        %1173 = vmatprep.subr.mxu0 0.0
        %1174 = vmatpush1.xpose.msra.mxu0 0.0
        %1175 = vmatprep.subr.mxu0 0.0
        %1176 = vmatpush1.xpose.msra.mxu0 0.0
        %1177 = vmatprep.subr.mxu0 0.0
        %1178 = vmatpush1.xpose.msra.mxu0 0.0
        %1179 = vmatprep.subr.mxu0 0.0
        %1180 = vmatpush1.xpose.msra.mxu0 0.0
        %1181 = vmatprep.subr.mxu0 0.0
        %1182 = vmatpush1.xpose.msra.mxu0 0.0
        %1183 = vmatprep.subr.mxu0 0.0
        %1184 = vmatpush1.xpose.msra.mxu0 0.0
        %1185 = vmatprep.subr.mxu0 0.0
        %1186 = vmatpush1.xpose.msra.mxu0 0.0
        %1187 = vmatprep.subr.mxu0 0.0
        %1188 = vmatpush1.xpose.msra.mxu0 0.0
        %1189 = vmatprep.subr.mxu0 0.0
        %1190 = vmatpush1.xpose.msra.mxu0 0.0
        %1191 = vmatprep.subr.mxu0 0.0
        %1192 = vmatpush1.xpose.msra.mxu0 0.0
        %1193 = vmatprep.subr.mxu0 0.0
        %1194 = vmatpush1.xpose.msra.mxu0 0.0
        %1195 = vmatprep.subr.mxu0 0.0
        %1196 = vmatpush1.xpose.msra.mxu0 0.0
        %1197 = vmatprep.mubr.f32.mxu0 0.0
        %1198 = vmatmul.mubr.f32.gmra.mrb[0].mxu0 %v1129
        %v1199 = vpop.f32.mrb[0].mxu0
        %v1200 = vadd.f32 0.0, %v1199
        %v1201 = vpop.f32.mrb[0].mxu0
        %1202 = vdwg.mxu0
        %v1203 = vld [vmem:[#allocation6] sm:$0xff]
        %v1204 = vld [vmem:[#allocation6 + $0x8] sm:$0xff]
        %v1205 = vld [vmem:[#allocation6 + $0x10] sm:$0xff]
        %v1206 = vld [vmem:[#allocation6 + $0x18] sm:$0xff]
        %v1207 = vsel %vm902, %v975, -inf
        %1208 = vmax.xlane.f32.xlu0 %v1207
        %v1209 = vpop.xlane.xlu0 %1208
        %v1210 = vsel %vm902, %v1050, -inf
        %1211 = vmax.xlane.f32.xlu0 %v1210
        %v1212 = vpop.xlane.xlu0 %1211
        %v1213 = vsel %vm902, %v1125, -inf
        %1214 = vmax.xlane.f32.xlu0 %v1213
        %v1215 = vpop.xlane.xlu0 %1214
        %v1216 = vsel %vm902, %v1200, -inf
        %1217 = vmax.xlane.f32.xlu0 %v1216
        %v1218 = vpop.xlane.xlu0 %1217
        %v1219 = vmax.f32 %v1203, %v1209
        %v1220 = vmax.f32 %v1204, %v1212
        %v1221 = vmax.f32 %v1205, %v1215
        %v1222 = vmax.f32 %v1206, %v1218
        %v1223 = vsub.f32 %v1203, %v1219
        %v1224 = vsub.f32 %v1204, %v1220
        %v1225 = vsub.f32 %v1205, %v1221
        %v1226 = vsub.f32 %v1206, %v1222
        %v1227 = vmul.f32 %v1223, 1.442695
        %v1228 = vpow.pop %v1227
        %v1229 = vmul.f32 %v1224, 1.442695
        %v1230 = vpow.pop %v1229
        %v1231 = vmul.f32 %v1225, 1.442695
        %v1232 = vpow.pop %v1231
        %v1233 = vmul.f32 %v1226, 1.442695
        %v1234 = vpow.pop %v1233
        %1236 = vset.pattern.permute.xlu0 0
        %1237 = vperm.xlu0 %1236, %v1219
        %v1238 = vpop.permute.xlu0 %1237
        %1241 = vset.pattern.permute.xlu0 0
        %1242 = vperm.xlu0 %1241, %v1220
        %v1243 = vpop.permute.xlu0 %1242
        %1246 = vset.pattern.permute.xlu0 0
        %1247 = vperm.xlu0 %1246, %v1221
        %v1248 = vpop.permute.xlu0 %1247
        %1251 = vset.pattern.permute.xlu0 0
        %1252 = vperm.xlu0 %1251, %v1222
        %v1253 = vpop.permute.xlu0 %1252
        %v1255 = vsub.f32 %v975, %v1238
        %v1256 = vsub.f32 %v1050, %v1243
        %v1257 = vsub.f32 %v1125, %v1248
        %v1258 = vsub.f32 %v1200, %v1253
        %v1259 = vmul.f32 %v1255, 1.442695
        %v1260 = vpow.pop %v1259
        %v1261 = vmul.f32 %v1256, 1.442695
        %v1262 = vpow.pop %v1261
        %v1263 = vmul.f32 %v1257, 1.442695
        %v1264 = vpow.pop %v1263
        %v1265 = vmul.f32 %v1258, 1.442695
        %v1266 = vpow.pop %v1265
        %v1267 = vld [vmem:[#allocation7] sm:$0xff]
        %v1268 = vld [vmem:[#allocation7 + $0x8] sm:$0xff]
        %v1269 = vld [vmem:[#allocation7 + $0x10] sm:$0xff]
        %v1270 = vld [vmem:[#allocation7 + $0x18] sm:$0xff]
        %v1271 = vmul.f32 %v1228, %v1267
        %v1272 = vmul.f32 %v1230, %v1268
        %v1273 = vmul.f32 %v1232, %v1269
        %v1274 = vmul.f32 %v1234, %v1270
        %v1275 = vsel %vm902, %v1260, 0.0
        %1276 = vadd.xlane.f32.xlu0 %v1275
        %v1277 = vpop.xlane.xlu0 %1276
        %v1278 = vsel %vm902, %v1262, 0.0
        %1279 = vadd.xlane.f32.xlu0 %v1278
        %v1280 = vpop.xlane.xlu0 %1279
        %v1281 = vsel %vm902, %v1264, 0.0
        %1282 = vadd.xlane.f32.xlu0 %v1281
        %v1283 = vpop.xlane.xlu0 %1282
        %v1284 = vsel %vm902, %v1266, 0.0
        %1285 = vadd.xlane.f32.xlu0 %v1284
        %v1286 = vpop.xlane.xlu0 %1285
        %v1287 = vadd.f32 %v1271, %v1277
        %v1288 = vadd.f32 %v1272, %v1280
        %v1289 = vadd.f32 %v1273, %v1283
        %v1290 = vadd.f32 %v1274, %v1286
        %vm1291 = vcmask 7168
        %1292 = vst.msk [vmem:[#allocation7] sm:$0xff] %vm1291, %v1287
        %1293 = vst.msk [vmem:[#allocation7 + $0x8] sm:$0xff] %vm1291, %v1288
        %1294 = vst.msk [vmem:[#allocation7 + $0x10] sm:$0xff] %vm1291, %v1289
        %1295 = vst.msk [vmem:[#allocation7 + $0x18] sm:$0xff] %vm1291, %v1290
        %v1296 = vld [vmem:[#allocation8] sm:$0xff]
        %v1297 = vld [vmem:[#allocation8 + $0x8] sm:$0xff]
        %v1298 = vld [vmem:[#allocation8 + $0x10] sm:$0xff]
        %v1299 = vld [vmem:[#allocation8 + $0x18] sm:$0xff]
        %1301 = vset.pattern.permute.xlu0 0
        %1302 = vperm.xlu0 %1301, %v1228
        %v1303 = vpop.permute.xlu0 %1302
        %1306 = vset.pattern.permute.xlu0 0
        %1307 = vperm.xlu0 %1306, %v1230
        %v1308 = vpop.permute.xlu0 %1307
        %1311 = vset.pattern.permute.xlu0 0
        %1312 = vperm.xlu0 %1311, %v1232
        %v1313 = vpop.permute.xlu0 %1312
        %1316 = vset.pattern.permute.xlu0 0
        %1317 = vperm.xlu0 %1316, %v1234
        %v1318 = vpop.permute.xlu0 %1317
        %v1320 = vmul.f32 %v1303, %v1296
        %v1321 = vmul.f32 %v1308, %v1297
        %v1322 = vmul.f32 %v1313, %v1298
        %v1323 = vmul.f32 %v1318, %v1299
        %v1325 = vsel %vm902, %v1260, 0
        %1327 = vmatprep.subr.mxu0 0.0
        %1328 = vmatpush1.msra.mxu0 %v880
        %1329 = vmatprep.subr.mxu0 0.0
        %1330 = vmatpush1.msra.mxu0 0.0
        %1331 = vmatprep.subr.mxu0 0.0
        %1332 = vmatpush1.msra.mxu0 0.0
        %1333 = vmatprep.subr.mxu0 0.0
        %1334 = vmatpush1.msra.mxu0 0.0
        %1335 = vmatprep.subr.mxu0 0.0
        %1336 = vmatpush1.msra.mxu0 0.0
        %1337 = vmatprep.subr.mxu0 0.0
        %1338 = vmatpush1.msra.mxu0 0.0
        %1339 = vmatprep.subr.mxu0 0.0
        %1340 = vmatpush1.msra.mxu0 0.0
        %1341 = vmatprep.subr.mxu0 0.0
        %1342 = vmatpush1.msra.mxu0 0.0
        %1343 = vmatprep.subr.mxu0 0.0
        %1344 = vmatpush1.msra.mxu0 0.0
        %1345 = vmatprep.subr.mxu0 0.0
        %1346 = vmatpush1.msra.mxu0 0.0
        %1347 = vmatprep.subr.mxu0 0.0
        %1348 = vmatpush1.msra.mxu0 0.0
        %1349 = vmatprep.subr.mxu0 0.0
        %1350 = vmatpush1.msra.mxu0 0.0
        %1351 = vmatprep.subr.mxu0 0.0
        %1352 = vmatpush1.msra.mxu0 0.0
        %1353 = vmatprep.subr.mxu0 0.0
        %1354 = vmatpush1.msra.mxu0 0.0
        %1355 = vmatprep.subr.mxu0 0.0
        %1356 = vmatpush1.msra.mxu0 0.0
        %1357 = vmatprep.subr.mxu0 0.0
        %1358 = vmatpush1.msra.mxu0 0.0
        %1359 = vmatprep.subr.mxu0 0.0
        %1360 = vmatpush1.msra.mxu0 0.0
        %1361 = vmatprep.subr.mxu0 0.0
        %1362 = vmatpush1.msra.mxu0 0.0
        %1363 = vmatprep.subr.mxu0 0.0
        %1364 = vmatpush1.msra.mxu0 0.0
        %1365 = vmatprep.subr.mxu0 0.0
        %1366 = vmatpush1.msra.mxu0 0.0
        %1367 = vmatprep.subr.mxu0 0.0
        %1368 = vmatpush1.msra.mxu0 0.0
        %1369 = vmatprep.subr.mxu0 0.0
        %1370 = vmatpush1.msra.mxu0 0.0
        %1371 = vmatprep.subr.mxu0 0.0
        %1372 = vmatpush1.msra.mxu0 0.0
        %1373 = vmatprep.subr.mxu0 0.0
        %1374 = vmatpush1.msra.mxu0 0.0
        %1375 = vmatprep.subr.mxu0 0.0
        %1376 = vmatpush1.msra.mxu0 0.0
        %1377 = vmatprep.subr.mxu0 0.0
        %1378 = vmatpush1.msra.mxu0 0.0
        %1379 = vmatprep.subr.mxu0 0.0
        %1380 = vmatpush1.msra.mxu0 0.0
        %1381 = vmatprep.subr.mxu0 0.0
        %1382 = vmatpush1.msra.mxu0 0.0
        %1383 = vmatprep.subr.mxu0 0.0
        %1384 = vmatpush1.msra.mxu0 0.0
        %1385 = vmatprep.subr.mxu0 0.0
        %1386 = vmatpush1.msra.mxu0 0.0
        %1387 = vmatprep.subr.mxu0 0.0
        %1388 = vmatpush1.msra.mxu0 0.0
        %1389 = vmatprep.subr.mxu0 0.0
        %1390 = vmatpush1.msra.mxu0 0.0
        %1391 = vmatprep.mubr.f32.mxu0 0.0
        %1392 = vmatmul.mubr.f32.gmra.mrb[0].mxu0 %v1325
        %v1393 = vpop.f32.mrb[0].mxu0
        %v1394 = vadd.f32 0.0, %v1393
        %v1395 = vpop.f32.mrb[0].mxu0
        %1396 = vdwg.mxu0
        %v1398 = vsel %vm902, %v1262, 0
        %1400 = vmatprep.subr.mxu0 0.0
        %1401 = vmatpush1.msra.mxu0 %v890
        %1402 = vmatprep.subr.mxu0 0.0
        %1403 = vmatpush1.msra.mxu0 0.0
        %1404 = vmatprep.subr.mxu0 0.0
        %1405 = vmatpush1.msra.mxu0 0.0
        %1406 = vmatprep.subr.mxu0 0.0
        %1407 = vmatpush1.msra.mxu0 0.0
        %1408 = vmatprep.subr.mxu0 0.0
        %1409 = vmatpush1.msra.mxu0 0.0
        %1410 = vmatprep.subr.mxu0 0.0
        %1411 = vmatpush1.msra.mxu0 0.0
        %1412 = vmatprep.subr.mxu0 0.0
        %1413 = vmatpush1.msra.mxu0 0.0
        %1414 = vmatprep.subr.mxu0 0.0
        %1415 = vmatpush1.msra.mxu0 0.0
        %1416 = vmatprep.subr.mxu0 0.0
        %1417 = vmatpush1.msra.mxu0 0.0
        %1418 = vmatprep.subr.mxu0 0.0
        %1419 = vmatpush1.msra.mxu0 0.0
        %1420 = vmatprep.subr.mxu0 0.0
        %1421 = vmatpush1.msra.mxu0 0.0
        %1422 = vmatprep.subr.mxu0 0.0
        %1423 = vmatpush1.msra.mxu0 0.0
        %1424 = vmatprep.subr.mxu0 0.0
        %1425 = vmatpush1.msra.mxu0 0.0
        %1426 = vmatprep.subr.mxu0 0.0
        %1427 = vmatpush1.msra.mxu0 0.0
        %1428 = vmatprep.subr.mxu0 0.0
        %1429 = vmatpush1.msra.mxu0 0.0
        %1430 = vmatprep.subr.mxu0 0.0
        %1431 = vmatpush1.msra.mxu0 0.0
        %1432 = vmatprep.subr.mxu0 0.0
        %1433 = vmatpush1.msra.mxu0 0.0
        %1434 = vmatprep.subr.mxu0 0.0
        %1435 = vmatpush1.msra.mxu0 0.0
        %1436 = vmatprep.subr.mxu0 0.0
        %1437 = vmatpush1.msra.mxu0 0.0
        %1438 = vmatprep.subr.mxu0 0.0
        %1439 = vmatpush1.msra.mxu0 0.0
        %1440 = vmatprep.subr.mxu0 0.0
        %1441 = vmatpush1.msra.mxu0 0.0
        %1442 = vmatprep.subr.mxu0 0.0
        %1443 = vmatpush1.msra.mxu0 0.0
        %1444 = vmatprep.subr.mxu0 0.0
        %1445 = vmatpush1.msra.mxu0 0.0
        %1446 = vmatprep.subr.mxu0 0.0
        %1447 = vmatpush1.msra.mxu0 0.0
        %1448 = vmatprep.subr.mxu0 0.0
        %1449 = vmatpush1.msra.mxu0 0.0
        %1450 = vmatprep.subr.mxu0 0.0
        %1451 = vmatpush1.msra.mxu0 0.0
        %1452 = vmatprep.subr.mxu0 0.0
        %1453 = vmatpush1.msra.mxu0 0.0
        %1454 = vmatprep.subr.mxu0 0.0
        %1455 = vmatpush1.msra.mxu0 0.0
        %1456 = vmatprep.subr.mxu0 0.0
        %1457 = vmatpush1.msra.mxu0 0.0
        %1458 = vmatprep.subr.mxu0 0.0
        %1459 = vmatpush1.msra.mxu0 0.0
        %1460 = vmatprep.subr.mxu0 0.0
        %1461 = vmatpush1.msra.mxu0 0.0
        %1462 = vmatprep.subr.mxu0 0.0
        %1463 = vmatpush1.msra.mxu0 0.0
        %1464 = vmatprep.mubr.f32.mxu0 0.0
        %1465 = vmatmul.mubr.f32.gmra.mrb[0].mxu0 %v1398
        %v1466 = vpop.f32.mrb[0].mxu0
        %v1467 = vadd.f32 0.0, %v1466
        %v1468 = vpop.f32.mrb[0].mxu0
        %1469 = vdwg.mxu0
        %v1471 = vsel %vm902, %v1264, 0
        %1473 = vmatprep.subr.mxu0 0.0
        %1474 = vmatpush1.msra.mxu0 %v893
        %1475 = vmatprep.subr.mxu0 0.0
        %1476 = vmatpush1.msra.mxu0 0.0
        %1477 = vmatprep.subr.mxu0 0.0
        %1478 = vmatpush1.msra.mxu0 0.0
        %1479 = vmatprep.subr.mxu0 0.0
        %1480 = vmatpush1.msra.mxu0 0.0
        %1481 = vmatprep.subr.mxu0 0.0
        %1482 = vmatpush1.msra.mxu0 0.0
        %1483 = vmatprep.subr.mxu0 0.0
        %1484 = vmatpush1.msra.mxu0 0.0
        %1485 = vmatprep.subr.mxu0 0.0
        %1486 = vmatpush1.msra.mxu0 0.0
        %1487 = vmatprep.subr.mxu0 0.0
        %1488 = vmatpush1.msra.mxu0 0.0
        %1489 = vmatprep.subr.mxu0 0.0
        %1490 = vmatpush1.msra.mxu0 0.0
        %1491 = vmatprep.subr.mxu0 0.0
        %1492 = vmatpush1.msra.mxu0 0.0
        %1493 = vmatprep.subr.mxu0 0.0
        %1494 = vmatpush1.msra.mxu0 0.0
        %1495 = vmatprep.subr.mxu0 0.0
        %1496 = vmatpush1.msra.mxu0 0.0
        %1497 = vmatprep.subr.mxu0 0.0
        %1498 = vmatpush1.msra.mxu0 0.0
        %1499 = vmatprep.subr.mxu0 0.0
        %1500 = vmatpush1.msra.mxu0 0.0
        %1501 = vmatprep.subr.mxu0 0.0
        %1502 = vmatpush1.msra.mxu0 0.0
        %1503 = vmatprep.subr.mxu0 0.0
        %1504 = vmatpush1.msra.mxu0 0.0
        %1505 = vmatprep.subr.mxu0 0.0
        %1506 = vmatpush1.msra.mxu0 0.0
        %1507 = vmatprep.subr.mxu0 0.0
        %1508 = vmatpush1.msra.mxu0 0.0
        %1509 = vmatprep.subr.mxu0 0.0
        %1510 = vmatpush1.msra.mxu0 0.0
        %1511 = vmatprep.subr.mxu0 0.0
        %1512 = vmatpush1.msra.mxu0 0.0
        %1513 = vmatprep.subr.mxu0 0.0
        %1514 = vmatpush1.msra.mxu0 0.0
        %1515 = vmatprep.subr.mxu0 0.0
        %1516 = vmatpush1.msra.mxu0 0.0
        %1517 = vmatprep.subr.mxu0 0.0
        %1518 = vmatpush1.msra.mxu0 0.0
        %1519 = vmatprep.subr.mxu0 0.0
        %1520 = vmatpush1.msra.mxu0 0.0
        %1521 = vmatprep.subr.mxu0 0.0
        %1522 = vmatpush1.msra.mxu0 0.0
        %1523 = vmatprep.subr.mxu0 0.0
        %1524 = vmatpush1.msra.mxu0 0.0
        %1525 = vmatprep.subr.mxu0 0.0
        %1526 = vmatpush1.msra.mxu0 0.0
        %1527 = vmatprep.subr.mxu0 0.0
        %1528 = vmatpush1.msra.mxu0 0.0
        %1529 = vmatprep.subr.mxu0 0.0
        %1530 = vmatpush1.msra.mxu0 0.0
        %1531 = vmatprep.subr.mxu0 0.0
        %1532 = vmatpush1.msra.mxu0 0.0
        %1533 = vmatprep.subr.mxu0 0.0
        %1534 = vmatpush1.msra.mxu0 0.0
        %1535 = vmatprep.subr.mxu0 0.0
        %1536 = vmatpush1.msra.mxu0 0.0
        %1537 = vmatprep.mubr.f32.mxu0 0.0
        %1538 = vmatmul.mubr.f32.gmra.mrb[0].mxu0 %v1471
        %v1539 = vpop.f32.mrb[0].mxu0
        %v1540 = vadd.f32 0.0, %v1539
        %v1541 = vpop.f32.mrb[0].mxu0
        %1542 = vdwg.mxu0
        %v1544 = vsel %vm902, %v1266, 0
        %1546 = vmatprep.subr.mxu0 0.0
        %1547 = vmatpush1.msra.mxu0 %v896
        %1548 = vmatprep.subr.mxu0 0.0
        %1549 = vmatpush1.msra.mxu0 0.0
        %1550 = vmatprep.subr.mxu0 0.0
        %1551 = vmatpush1.msra.mxu0 0.0
        %1552 = vmatprep.subr.mxu0 0.0
        %1553 = vmatpush1.msra.mxu0 0.0
        %1554 = vmatprep.subr.mxu0 0.0
        %1555 = vmatpush1.msra.mxu0 0.0
        %1556 = vmatprep.subr.mxu0 0.0
        %1557 = vmatpush1.msra.mxu0 0.0
        %1558 = vmatprep.subr.mxu0 0.0
        %1559 = vmatpush1.msra.mxu0 0.0
        %1560 = vmatprep.subr.mxu0 0.0
        %1561 = vmatpush1.msra.mxu0 0.0
        %1562 = vmatprep.subr.mxu0 0.0
        %1563 = vmatpush1.msra.mxu0 0.0
        %1564 = vmatprep.subr.mxu0 0.0
        %1565 = vmatpush1.msra.mxu0 0.0
        %1566 = vmatprep.subr.mxu0 0.0
        %1567 = vmatpush1.msra.mxu0 0.0
        %1568 = vmatprep.subr.mxu0 0.0
        %1569 = vmatpush1.msra.mxu0 0.0
        %1570 = vmatprep.subr.mxu0 0.0
        %1571 = vmatpush1.msra.mxu0 0.0
        %1572 = vmatprep.subr.mxu0 0.0
        %1573 = vmatpush1.msra.mxu0 0.0
        %1574 = vmatprep.subr.mxu0 0.0
        %1575 = vmatpush1.msra.mxu0 0.0
        %1576 = vmatprep.subr.mxu0 0.0
        %1577 = vmatpush1.msra.mxu0 0.0
        %1578 = vmatprep.subr.mxu0 0.0
        %1579 = vmatpush1.msra.mxu0 0.0
        %1580 = vmatprep.subr.mxu0 0.0
        %1581 = vmatpush1.msra.mxu0 0.0
        %1582 = vmatprep.subr.mxu0 0.0
        %1583 = vmatpush1.msra.mxu0 0.0
        %1584 = vmatprep.subr.mxu0 0.0
        %1585 = vmatpush1.msra.mxu0 0.0
        %1586 = vmatprep.subr.mxu0 0.0
        %1587 = vmatpush1.msra.mxu0 0.0
        %1588 = vmatprep.subr.mxu0 0.0
        %1589 = vmatpush1.msra.mxu0 0.0
        %1590 = vmatprep.subr.mxu0 0.0
        %1591 = vmatpush1.msra.mxu0 0.0
        %1592 = vmatprep.subr.mxu0 0.0
        %1593 = vmatpush1.msra.mxu0 0.0
        %1594 = vmatprep.subr.mxu0 0.0
        %1595 = vmatpush1.msra.mxu0 0.0
        %1596 = vmatprep.subr.mxu0 0.0
        %1597 = vmatpush1.msra.mxu0 0.0
        %1598 = vmatprep.subr.mxu0 0.0
        %1599 = vmatpush1.msra.mxu0 0.0
        %1600 = vmatprep.subr.mxu0 0.0
        %1601 = vmatpush1.msra.mxu0 0.0
        %1602 = vmatprep.subr.mxu0 0.0
        %1603 = vmatpush1.msra.mxu0 0.0
        %1604 = vmatprep.subr.mxu0 0.0
        %1605 = vmatpush1.msra.mxu0 0.0
        %1606 = vmatprep.subr.mxu0 0.0
        %1607 = vmatpush1.msra.mxu0 0.0
        %1608 = vmatprep.subr.mxu0 0.0
        %1609 = vmatpush1.msra.mxu0 0.0
        %1610 = vmatprep.mubr.f32.mxu0 0.0
        %1611 = vmatmul.mubr.f32.gmra.mrb[0].mxu0 %v1544
        %v1612 = vpop.f32.mrb[0].mxu0
        %v1613 = vadd.f32 0.0, %v1612
        %v1614 = vpop.f32.mrb[0].mxu0
        %1615 = vdwg.mxu0
        %v1616 = vadd.f32 %v1320, %v1394
        %v1617 = vadd.f32 %v1321, %v1467
        %v1618 = vadd.f32 %v1322, %v1540
        %v1619 = vadd.f32 %v1323, %v1613
        %1620 = vst.msk [vmem:[#allocation8] sm:$0xff] %vm902, %v1616
        %1621 = vst.msk [vmem:[#allocation8 + $0x8] sm:$0xff] %vm902, %v1617
        %1622 = vst.msk [vmem:[#allocation8 + $0x10] sm:$0xff] %vm902, %v1618
        %1623 = vst.msk [vmem:[#allocation8 + $0x18] sm:$0xff] %vm902, %v1619
        %1624 = vst.msk [vmem:[#allocation6] sm:$0xff] %vm1291, %v1219
        %1625 = vst.msk [vmem:[#allocation6 + $0x8] sm:$0xff] %vm1291, %v1220
        %1626 = vst.msk [vmem:[#allocation6 + $0x10] sm:$0xff] %vm1291, %v1221
        %1627 = vst.msk [vmem:[#allocation6 + $0x18] sm:$0xff] %vm1291, %v1222
        // Predicated region
        $region101: #{tpu_custom_call.1} parent=63 // pred_check
          %p1628 = pneg %p575
        $region102: #{tpu_custom_call.1} parent=63 // pred_check_branch
          %1630 = sbr.rel (%p1628) target = $region104
        $region103: #{tpu_custom_call.1} parent=63 // pred_region
          %v1631 = vld [vmem:[#allocation7] sm:$0xff]
          %v1632 = vld [vmem:[#allocation7 + $0x8] sm:$0xff]
          %v1633 = vld [vmem:[#allocation7 + $0x10] sm:$0xff]
          %v1634 = vld [vmem:[#allocation7 + $0x18] sm:$0xff]
          %v1635 = vrcp.pop %v1631
          %v1636 = vrcp.pop %v1632
          %v1637 = vrcp.pop %v1633
          %v1638 = vrcp.pop %v1634
          %v1639 = vld [vmem:[#allocation8] sm:$0xff]
          %1641 = vset.pattern.permute.xlu0 0
          %1642 = vperm.xlu0 %1641, %v1635
          %v1643 = vpop.permute.xlu0 %1642
          %v1645 = vmul.f32 %v1639, %v1643
          %1646 = vst.msk [vmem:[#allocation5] sm:$0xff] %vm902, %v1645
          %s1647 = scalar_lea.vmem [#allocation8], 8
          %v1648 = vld [vmem:[%s1647] sm:$0xff]
          %1650 = vset.pattern.permute.xlu0 0
          %1651 = vperm.xlu0 %1650, %v1636
          %v1652 = vpop.permute.xlu0 %1651
          %v1654 = vmul.f32 %v1648, %v1652
          %1656 = vrot.lane.b32.xlu0 %v1654, 8
          %v1657 = vpop.permute.xlu0 %1656
          %vm1659 = vcmask 130112
          %1660 = vst.msk [vmem:[#allocation5] sm:$0xff] %vm1659, %v1657
          %s1661 = scalar_lea.vmem [#allocation8], 16
          %v1662 = vld [vmem:[%s1661] sm:$0xff]
          %1664 = vset.pattern.permute.xlu0 0
          %1665 = vperm.xlu0 %1664, %v1637
          %v1666 = vpop.permute.xlu0 %1665
          %v1668 = vmul.f32 %v1662, %v1666
          %1670 = vrot.lane.b32.xlu0 %v1668, 16
          %v1671 = vpop.permute.xlu0 %1670
          %vm1673 = vcmask 195712
          %1674 = vst.msk [vmem:[#allocation5] sm:$0xff] %vm1673, %v1671
          %s1675 = scalar_lea.vmem [#allocation8], 24
          %v1676 = vld [vmem:[%s1675] sm:$0xff]
          %1678 = vset.pattern.permute.xlu0 0
          %1679 = vperm.xlu0 %1678, %v1638
          %v1680 = vpop.permute.xlu0 %1679
          %v1682 = vmul.f32 %v1676, %v1680
          %1684 = vrot.lane.b32.xlu0 %v1682, 24
          %v1685 = vpop.permute.xlu0 %1684
          %vm1687 = vcmask 261312
          %1688 = vst.msk [vmem:[#allocation5] sm:$0xff] %vm1687, %v1685
          %v1689 = vld [vmem:[#allocation5] sm:$0xff]
          %v1690 = vld [vmem:[%s9] sm:$0xff]
          %v1691 = vld [vmem:[%s9 + $0x8] sm:$0xff]
          %v1692 = vld [vmem:[%s9 + $0x10] sm:$0xff]
          %v1693 = vld [vmem:[%s9 + $0x18] sm:$0xff]
          %v1694 = vld [vmem:[%s10] sm:$0x1]
          %v1696 = vlaneseq
          %v1697 = vshrl.u32 %v1696, 7
          %v1698 = vsub.s32 0, %v1697
          %v1699 = vrot.slane %v1694, %v1698
          %vm1701 = vcmask 261120
          %v1703 = vsel %vm1701, %v1689, 0
          %1705 = vmatprep.subr.mxu0 0.0
          %1706 = vmatpush1.msra.mxu0 %v1690
          %1707 = vmatprep.subr.mxu0 0.0
          %1708 = vmatpush1.msra.mxu0 %v1691
          %1709 = vmatprep.subr.mxu0 0.0
          %1710 = vmatpush1.msra.mxu0 %v1692
          %1711 = vmatprep.subr.mxu0 0.0
          %1712 = vmatpush1.msra.mxu0 %v1693
          %1713 = vmatprep.subr.mxu0 0.0
          %1714 = vmatpush1.msra.mxu0 0.0
          %1715 = vmatprep.subr.mxu0 0.0
          %1716 = vmatpush1.msra.mxu0 0.0
          %1717 = vmatprep.subr.mxu0 0.0
          %1718 = vmatpush1.msra.mxu0 0.0
          %1719 = vmatprep.subr.mxu0 0.0
          %1720 = vmatpush1.msra.mxu0 0.0
          %1721 = vmatprep.subr.mxu0 0.0
          %1722 = vmatpush1.msra.mxu0 0.0
          %1723 = vmatprep.subr.mxu0 0.0
          %1724 = vmatpush1.msra.mxu0 0.0
          %1725 = vmatprep.subr.mxu0 0.0
          %1726 = vmatpush1.msra.mxu0 0.0
          %1727 = vmatprep.subr.mxu0 0.0
          %1728 = vmatpush1.msra.mxu0 0.0
          %1729 = vmatprep.subr.mxu0 0.0
          %1730 = vmatpush1.msra.mxu0 0.0
          %1731 = vmatprep.subr.mxu0 0.0
          %1732 = vmatpush1.msra.mxu0 0.0
          %1733 = vmatprep.subr.mxu0 0.0
          %1734 = vmatpush1.msra.mxu0 0.0
          %1735 = vmatprep.subr.mxu0 0.0
          %1736 = vmatpush1.msra.mxu0 0.0
          %1737 = vmatprep.subr.mxu0 0.0
          %1738 = vmatpush1.msra.mxu0 0.0
          %1739 = vmatprep.subr.mxu0 0.0
          %1740 = vmatpush1.msra.mxu0 0.0
          %1741 = vmatprep.subr.mxu0 0.0
          %1742 = vmatpush1.msra.mxu0 0.0
          %1743 = vmatprep.subr.mxu0 0.0
          %1744 = vmatpush1.msra.mxu0 0.0
          %1745 = vmatprep.subr.mxu0 0.0
          %1746 = vmatpush1.msra.mxu0 0.0
          %1747 = vmatprep.subr.mxu0 0.0
          %1748 = vmatpush1.msra.mxu0 0.0
          %1749 = vmatprep.subr.mxu0 0.0
          %1750 = vmatpush1.msra.mxu0 0.0
          %1751 = vmatprep.subr.mxu0 0.0
          %1752 = vmatpush1.msra.mxu0 0.0
          %1753 = vmatprep.subr.mxu0 0.0
          %1754 = vmatpush1.msra.mxu0 0.0
          %1755 = vmatprep.subr.mxu0 0.0
          %1756 = vmatpush1.msra.mxu0 0.0
          %1757 = vmatprep.subr.mxu0 0.0
          %1758 = vmatpush1.msra.mxu0 0.0
          %1759 = vmatprep.subr.mxu0 0.0
          %1760 = vmatpush1.msra.mxu0 0.0
          %1761 = vmatprep.subr.mxu0 0.0
          %1762 = vmatpush1.msra.mxu0 0.0
          %1763 = vmatprep.subr.mxu0 0.0
          %1764 = vmatpush1.msra.mxu0 0.0
          %1765 = vmatprep.subr.mxu0 0.0
          %1766 = vmatpush1.msra.mxu0 0.0
          %1767 = vmatprep.subr.mxu0 0.0
          %1768 = vmatpush1.msra.mxu0 0.0
          %1769 = vmatprep.mubr.f32.mxu0 0.0
          %1770 = vmatmul.mubr.f32.gmra.mrb[0].mxu0 %v1703
          %v1771 = vpop.f32.mrb[0].mxu0
          %v1772 = vadd.f32 %v1699, %v1771
          %v1773 = vpop.f32.mrb[0].mxu0
          %1774 = vdwg.mxu0
          %1775 = vst.msk [vmem:[%s570] sm:$0xff] %vm1701, %v1772
        $region104: #{tpu_custom_call.1} parent=63 // pred_fallthru
          _
        %s1776 = sand.u32 %s322, 1
        %s1777 = scalar_lea.sflag [#allocation11], %s1776
        %s1778 = sand.u32 %s322, 1
        %s1779 = smul.addr %s1778, 8
        %s1780 = scalar_lea.vmem [#allocation21], %s1779
        // Predicated region
        $region105: #{tpu_custom_call.1} parent=63 // pred_check
          %p1781 = pneg %p332
        $region106: #{tpu_custom_call.1} parent=63 // pred_check_branch
          %1783 = sbr.rel (%p1781) target = $region108
        $region107: #{tpu_custom_call.1} parent=63 // pred_region
          %s1785 = ssub.s32 128, 128
          %1786 = vsyncadd %s1777, %s1785
          %s1787 = sadd.s32 %s39, %s38
          %s1788 = smul.addr %s1787, 128
          %s1789 = scalar_lea.hbm %s11, %s1788
          %s1791 = sshll.u32 %s1780, 4
          %s1792 = int_to_ptr.vmem [resolvable:$true] %s1791
          %1794 = dma.vmem_to_hbm [thread:$0]  %s1792, 128, %s1789, %s1777
        $region108: #{tpu_custom_call.1} parent=63 // pred_fallthru
          _
      $region64: #{tpu_custom_call.1} parent=5 // pred_fallthru
        _
      %p1795 = scmp.le.s32.totalorder 2, %s28
      // Predicated region
      $region109: #{tpu_custom_call.1} parent=5 // pred_check
        %p1796 = pneg %p1795
      $region110: #{tpu_custom_call.1} parent=5 // pred_check_branch
        %1798 = sbr.rel (%p1796) target = $region112
      $region111: #{tpu_custom_call.1} parent=5 // pred_region
        %s1799 = ssub.s32 %s28, 2
        // Predicated region
        $region113: #{tpu_custom_call.1} parent=111 // pred_check
          %p1800 = pneg %p338
        $region114: #{tpu_custom_call.1} parent=111 // pred_check_branch
          %1802 = sbr.rel (%p1800) target = $region116
        $region115: #{tpu_custom_call.1} parent=111 // pred_region
          %s1803 = sand.u32 %s323, 1
          %s1804 = scalar_lea.sflag [#allocation11], %s1803
          %s1805 = sand.u32 %s323, 1
          %s1806 = smul.addr %s1805, 8
          %s1807 = scalar_lea.vmem [#allocation21], %s1806
          %1808 = dma.done %s1804, 128
        $region116: #{tpu_custom_call.1} parent=111 // pred_fallthru
          _
      $region112: #{tpu_custom_call.1} parent=5 // pred_fallthru
        _
    $region6: #{tpu_custom_call.1} parent=1 // loop_footer
      %s32 = sadd.s32 1, %s28
    $region7: #{tpu_custom_call.1} parent=1 // loop_footer_branch
      %27 = sbr.rel target = $region3
    $region8: #{tpu_custom_call.1} parent=1 // loop_exit
      _
    %1809 = vsyncpa [#allocation10], 1
    %s1810 = scalar_lea.sflag [#allocation10], 1
    %1811 = vsyncpa %s1810, 1
    %1812 = vsyncpa [#allocation13], 1
    %s1813 = scalar_lea.sflag [#allocation13], 1
    %1814 = vsyncpa %s1813, 1
    %1815 = vsyncpa [#allocation16], 1
    %1816 = vsyncpa [#allocation19], 1
    %1817 = vsyncpa [#allocation11], 1
    %s1818 = scalar_lea.sflag [#allocation11], 1
    %1819 = vsyncpa %s1818, 1

</llo_original>
